<compile_context>
chip_gen: v6e
topology: v6e:2x2x1
jax: 0.10.0
libtpu: 0.0.40
codegen_flags: <defaults>
</compile_context>

<pallas_src>
import jax
import jax.numpy as jnp
import numpy as np
from jax.experimental import pallas as pl
from jax.experimental.pallas import tpu as pltpu


def _round_up(n, m):
    return ((n + m - 1) // m) * m


def _auto_config():
    """(default batch tile, vmem limit) based on the local TPU generation."""
    try:
        vmem = pltpu.get_tpu_info().vmem_capacity_bytes
    except Exception:
        vmem = 64 * 1024 * 1024
    if vmem >= 128 * 1024 * 1024:          # v5e / v6e: 128 MiB VMEM
        return 4096, 64 * 1024 * 1024
    return 2048, 40 * 1024 * 1024          # v7x: 64 MiB VMEM per TensorCore


def prepare_item_params(params):
    """Host-side (numpy) packing of the five nn.Linear weights. Call once."""
    ws = [np.asarray(params[k], dtype=np.float32)
          for k in ("w_dec", "w_mov", "w_cat", "w_per", "w_com")]
    L = ws[0].shape[0]
    ns = tuple(int(w.shape[1]) for w in ws)
    nseg = len(ws)
    D = int(sum(ns))
    nout = nseg * L

    wbd = np.zeros((D, nout), dtype=np.float32)    # block-diagonal weights [D, 5L]
    s = np.zeros((D, nseg), dtype=np.float32)      # segment-sum indicator [D, 5]
    e = np.zeros((nseg, nout), dtype=np.float32)   # scale expansion       [5, 5L]
    r = 0
    for i, (w, n) in enumerate(zip(ws, ns)):
        wbd[r:r + n, i * L:(i + 1) * L] = w.T
        s[r:r + n, i] = 1.0
        e[i, i * L:(i + 1) * L] = 1.0
        r += n

    # NOTE: folding `s` into `wbd` (one [Bt, 5L+5] matmul) was reviewed as a
    # low-priority win; kept separate for clean 160-lane output layout.
    return {"wbd": jnp.asarray(wbd), "s": jnp.asarray(s), "e": jnp.asarray(e),
            "ns": ns, "L": L, "D": D, "nout": nout}


def _make_item_kernel(ns):
    offs = []
    o = 0
    for n in ns:
        offs.append(o)
        o += n

    def kernel(x0_ref, x1_ref, x2_ref, x3_ref, x4_ref,
               wbd_ref, s_ref, e_ref, o_ref):
        xs = (x0_ref, x1_ref, x2_ref, x3_ref, x4_ref)
        emb = None     # [Bt, 5L] fused embeddings (block-diagonal weight rows)
        sums = None    # [Bt, 5]  per-segment row sums (indicator weight rows)
        for x_ref, off, n in zip(xs, offs, ns):
            xi = x_ref[...].astype(jnp.float32)
            ei = jnp.dot(xi, wbd_ref[pl.ds(off, n), :],
                         preferred_element_type=jnp.float32)
            ti = jnp.dot(xi, s_ref[pl.ds(off, n), :],
                         preferred_element_type=jnp.float32)
            emb = ei if emb is None else emb + ei
            sums = ti if sums is None else sums + ti

        # Rows whose segment sum is zero stay unnormalized (PyTorch nonzero-row
        # indexing) -> substitute 1 in the denominator.
        safe = jnp.where(sums != 0.0, sums, 1.0)
        col = jax.lax.broadcasted_iota(jnp.int32, safe.shape, 1)
        # Combined per-segment denominator, built at [Bt, 5] width:
        #   dec -> dec_sum * mov_sum (bug-for-bug with the original module),
        #   mov -> 1 (never normalized), cat/per/com -> their own sums.
        a = jnp.where(col == 1, 1.0, safe)           # [dec, 1, cat, per, com]
        b = jnp.where(col == 0, safe[:, 1:2], 1.0)   # [mov, 1, 1,   1,   1  ]
        denom = a * b

        inv = pl.reciprocal(denom, approx=True)      # EUP slot
        inv = inv * (2.0 - denom * inv)              # one Newton step -> ~f32 exact

        # Expand [Bt, 5] -> [Bt, 5L] once; single multiply against emb.
        factor = jnp.dot(inv, e_ref[...], preferred_element_type=jnp.float32)
        o_ref[...] = (emb * factor).astype(o_ref.dtype)

    return kernel


def item_forward(decade, movie, category, person, company, packed, *,
                 b_tile=None, out_dtype=jnp.float32, vmem_limit_bytes=None):
    ns, D, nout = packed["ns"], packed["D"], packed["nout"]
    B = decade.shape[0]

    auto_tile, auto_vmem = _auto_config()
    if vmem_limit_bytes is None:
        vmem_limit_bytes = auto_vmem
    if b_tile is None:
        # Big tiles amortize the ~0.35us/step overhead; cap at ceil(B/2) so the
        # "parallel" batch grid always has >= 2 steps (v7x has two TensorCores).
        b_tile = min(auto_tile, _round_up(max(-(-B // 2), 8), 8))
    b_tile = max(8, _round_up(int(b_tile), 8))       # f32 sublane packing

    grid = (pl.cdiv(B, b_tile),)        # ragged tail handled by partial blocks

    def x_spec(n):
        return pl.BlockSpec((b_tile, n), lambda i: (i, 0))

    def const_spec(shape):
        return pl.BlockSpec(shape, lambda i: (0, 0))

    return pl.pallas_call(
        _make_item_kernel(ns),
        out_shape=jax.ShapeDtypeStruct((B, nout), out_dtype),
        grid=grid,
        in_specs=[x_spec(n) for n in ns] + [
            const_spec((D, nout)),      # block-diagonal weights (VMEM-resident)
            const_spec((D, 5)),         # segment-sum indicator
            const_spec((5, nout)),      # scale expansion
        ],
        out_specs=pl.BlockSpec((b_tile, nout), lambda i: (i, 0)),
        compiler_params=pltpu.CompilerParams(
            dimension_semantics=("parallel",),
            vmem_limit_bytes=vmem_limit_bytes,
        ),
    )(decade, movie, category, person, company,
      packed["wbd"], packed["s"], packed["e"])


def item_reference(decade, movie, category, person, company, params):
    """Pure-JAX mirror of the PyTorch forward (including its normalization bug)."""
    hp = jax.lax.Precision.HIGHEST

    def emb(x, w):                      # w: PyTorch nn.Linear layout [L, n_x]
        return jnp.dot(x, w.T, precision=hp)

    def safe(sv):
        return jnp.where(sv != 0.0, sv, 1.0)

    dec = emb(decade, params["w_dec"]) / safe(decade.sum(1, keepdims=True))
    mov = emb(movie, params["w_mov"])
    dec = dec / safe(movie.sum(1, keepdims=True))          # the original bug
    cat = emb(category, params["w_cat"]) / safe(category.sum(1, keepdims=True))
    per = emb(person, params["w_per"]) / safe(person.sum(1, keepdims=True))
    com = emb(company, params["w_com"]) / safe(company.sum(1, keepdims=True))
    return jnp.concatenate([dec, mov, cat, per, com], axis=1)


if __name__ == "__main__":
    n_decade, n_movies, n_categories, n_persons, n_companies = 12, 20, 8, 16, 6
    latent_factor = 32
    B = 24          # not a multiple of b_tile=16 -> exercises the partial tail block

    key = jax.random.PRNGKey(0)
    ks = jax.random.split(key, 10)
    dec_x = jax.random.bernoulli(ks[0], 0.3, (B, n_decade)).astype(jnp.float32)
    mov_x = jax.random.bernoulli(ks[1], 0.3, (B, n_movies)).astype(jnp.float32)
    cat_x = jax.random.bernoulli(ks[2], 0.3, (B, n_categories)).astype(jnp.float32)
    per_x = jax.random.bernoulli(ks[3], 0.3, (B, n_persons)).astype(jnp.float32)
    com_x = jax.random.bernoulli(ks[4], 0.3, (B, n_companies)).astype(jnp.float32)

    def init(k, shape):
        return 0.1 * jax.random.normal(k, shape, dtype=jnp.float32)

    params = {                                   # PyTorch nn.Linear layout [out, in]
        "w_dec": init(ks[5], (latent_factor, n_decade)),
        "w_mov": init(ks[6], (latent_factor, n_movies)),
        "w_cat": init(ks[7], (latent_factor, n_categories)),
        "w_per": init(ks[8], (latent_factor, n_persons)),
        "w_com": init(ks[9], (latent_factor, n_companies)),
    }

    packed = prepare_item_params(params)         # host-side packing, done once

    out = item_forward(dec_x, mov_x, cat_x, per_x, com_x, packed, b_tile=16)
    out = jax.block_until_ready(out)

    ref = item_reference(dec_x, mov_x, cat_x, per_x, com_x, params)
    assert out.shape == (B, 5 * latent_factor)
    assert out.dtype == jnp.float32
    assert jnp.allclose(out, ref, atol=2e-3, rtol=2e-3), float(
        jnp.max(jnp.abs(out - ref)))

    # bf16 writeback path (halves the dominant HBM write stream)
    out_bf16 = item_forward(dec_x, mov_x, cat_x, per_x, com_x, packed,
                            b_tile=16, out_dtype=jnp.bfloat16)
    out_bf16 = jax.block_until_ready(out_bf16)
    assert out_bf16.dtype == jnp.bfloat16
    assert jnp.allclose(out_bf16.astype(jnp.float32), ref, atol=2e-2, rtol=2e-2)

    print("KERNEL_OK")
</pallas_src>

<mosaic_0001>
module attributes {stable_mosaic.version = 11 : i64} {
  func.func @kernel(%arg0: i32, %arg1: memref<16x12xf32, #tpu.memory_space<vmem>>, %arg2: memref<16x20xf32, #tpu.memory_space<vmem>>, %arg3: memref<16x8xf32, #tpu.memory_space<vmem>>, %arg4: memref<16x16xf32, #tpu.memory_space<vmem>>, %arg5: memref<16x6xf32, #tpu.memory_space<vmem>>, %arg6: memref<62x160xf32, #tpu.memory_space<vmem>>, %arg7: memref<62x5xf32, #tpu.memory_space<vmem>>, %arg8: memref<5x160xf32, #tpu.memory_space<vmem>>, %arg9: memref<16x160xf32, #tpu.memory_space<vmem>>) attributes {dimension_semantics = [#tpu.dimension_semantics<parallel>], iteration_bounds = array<i64: 2>, scalar_prefetch = 0 : i64, scratch_operands = 0 : i64, tpu.core_type = #tpu.core_type<tc>, window_params = [{transform_indices = @transform_0, window_bounds = array<i64: 16, 12>}, {transform_indices = @transform_1, window_bounds = array<i64: 16, 20>}, {transform_indices = @transform_2, window_bounds = array<i64: 16, 8>}, {transform_indices = @transform_3, window_bounds = array<i64: 16, 16>}, {transform_indices = @transform_4, window_bounds = array<i64: 16, 6>}, {pipeline_mode = #tpu.pipeline_mode<synchronous>, transform_indices = @transform_5, window_bounds = array<i64: 62, 160>}, {pipeline_mode = #tpu.pipeline_mode<synchronous>, transform_indices = @transform_6, window_bounds = array<i64: 62, 5>}, {pipeline_mode = #tpu.pipeline_mode<synchronous>, transform_indices = @transform_7, window_bounds = array<i64: 5, 160>}, {transform_indices = @transform_8, window_bounds = array<i64: 16, 160>}]} {
    %c0 = arith.constant 0 : index
    %c0_0 = arith.constant 0 : index
    %0 = vector.load %arg1[%c0, %c0_0] : memref<16x12xf32, #tpu.memory_space<vmem>>, vector<16x12xf32>
    %c0_1 = arith.constant 0 : index
    %c0_2 = arith.constant 0 : index
    %1 = vector.load %arg6[%c0_1, %c0_2] : memref<62x160xf32, #tpu.memory_space<vmem>>, vector<12x160xf32>
    %cst = arith.constant dense<0.000000e+00> : vector<16x160xf32>
    %2 = tpu.matmul %0, %1, %cst {dimension_numbers = #tpu.dot_dimension_numbers<[1], [0], [0], [1], [0, 0, 1, 1], [], []>} : vector<16x12xf32>, vector<12x160xf32>, vector<16x160xf32> -> vector<16x160xf32>
    %c0_3 = arith.constant 0 : index
    %c0_4 = arith.constant 0 : index
    %3 = vector.load %arg7[%c0_3, %c0_4] : memref<62x5xf32, #tpu.memory_space<vmem>>, vector<12x5xf32>
    %cst_5 = arith.constant dense<0.000000e+00> : vector<16x5xf32>
    %4 = tpu.matmul %0, %3, %cst_5 {dimension_numbers = #tpu.dot_dimension_numbers<[1], [0], [0], [1], [0, 0, 1, 1], [], []>} : vector<16x12xf32>, vector<12x5xf32>, vector<16x5xf32> -> vector<16x5xf32>
    %c0_6 = arith.constant 0 : index
    %c0_7 = arith.constant 0 : index
    %5 = vector.load %arg2[%c0_6, %c0_7] : memref<16x20xf32, #tpu.memory_space<vmem>>, vector<16x20xf32>
    %c12 = arith.constant 12 : index
    %c0_8 = arith.constant 0 : index
    %6 = vector.load %arg6[%c12, %c0_8] : memref<62x160xf32, #tpu.memory_space<vmem>>, vector<20x160xf32>
    %cst_9 = arith.constant dense<0.000000e+00> : vector<16x160xf32>
    %7 = tpu.matmul %5, %6, %cst_9 {dimension_numbers = #tpu.dot_dimension_numbers<[1], [0], [0], [1], [0, 0, 1, 1], [], []>} : vector<16x20xf32>, vector<20x160xf32>, vector<16x160xf32> -> vector<16x160xf32>
    %c12_10 = arith.constant 12 : index
    %c0_11 = arith.constant 0 : index
    %8 = vector.load %arg7[%c12_10, %c0_11] : memref<62x5xf32, #tpu.memory_space<vmem>>, vector<20x5xf32>
    %cst_12 = arith.constant dense<0.000000e+00> : vector<16x5xf32>
    %9 = tpu.matmul %5, %8, %cst_12 {dimension_numbers = #tpu.dot_dimension_numbers<[1], [0], [0], [1], [0, 0, 1, 1], [], []>} : vector<16x20xf32>, vector<20x5xf32>, vector<16x5xf32> -> vector<16x5xf32>
    %10 = arith.addf %2, %7 : vector<16x160xf32>
    %11 = arith.addf %4, %9 : vector<16x5xf32>
    %c0_13 = arith.constant 0 : index
    %c0_14 = arith.constant 0 : index
    %12 = vector.load %arg3[%c0_13, %c0_14] : memref<16x8xf32, #tpu.memory_space<vmem>>, vector<16x8xf32>
    %c32 = arith.constant 32 : index
    %c0_15 = arith.constant 0 : index
    %13 = vector.load %arg6[%c32, %c0_15] : memref<62x160xf32, #tpu.memory_space<vmem>>, vector<8x160xf32>
    %cst_16 = arith.constant dense<0.000000e+00> : vector<16x160xf32>
    %14 = tpu.matmul %12, %13, %cst_16 {dimension_numbers = #tpu.dot_dimension_numbers<[1], [0], [0], [1], [0, 0, 1, 1], [], []>} : vector<16x8xf32>, vector<8x160xf32>, vector<16x160xf32> -> vector<16x160xf32>
    %c32_17 = arith.constant 32 : index
    %c0_18 = arith.constant 0 : index
    %15 = vector.load %arg7[%c32_17, %c0_18] : memref<62x5xf32, #tpu.memory_space<vmem>>, vector<8x5xf32>
    %cst_19 = arith.constant dense<0.000000e+00> : vector<16x5xf32>
    %16 = tpu.matmul %12, %15, %cst_19 {dimension_numbers = #tpu.dot_dimension_numbers<[1], [0], [0], [1], [0, 0, 1, 1], [], []>} : vector<16x8xf32>, vector<8x5xf32>, vector<16x5xf32> -> vector<16x5xf32>
    %17 = arith.addf %10, %14 : vector<16x160xf32>
    %18 = arith.addf %11, %16 : vector<16x5xf32>
    %c0_20 = arith.constant 0 : index
    %c0_21 = arith.constant 0 : index
    %19 = vector.load %arg4[%c0_20, %c0_21] : memref<16x16xf32, #tpu.memory_space<vmem>>, vector<16x16xf32>
    %c40 = arith.constant 40 : index
    %c0_22 = arith.constant 0 : index
    %20 = vector.load %arg6[%c40, %c0_22] : memref<62x160xf32, #tpu.memory_space<vmem>>, vector<16x160xf32>
    %cst_23 = arith.constant dense<0.000000e+00> : vector<16x160xf32>
    %21 = tpu.matmul %19, %20, %cst_23 {dimension_numbers = #tpu.dot_dimension_numbers<[1], [0], [0], [1], [0, 0, 1, 1], [], []>} : vector<16x16xf32>, vector<16x160xf32>, vector<16x160xf32> -> vector<16x160xf32>
    %c40_24 = arith.constant 40 : index
    %c0_25 = arith.constant 0 : index
    %22 = vector.load %arg7[%c40_24, %c0_25] : memref<62x5xf32, #tpu.memory_space<vmem>>, vector<16x5xf32>
    %cst_26 = arith.constant dense<0.000000e+00> : vector<16x5xf32>
    %23 = tpu.matmul %19, %22, %cst_26 {dimension_numbers = #tpu.dot_dimension_numbers<[1], [0], [0], [1], [0, 0, 1, 1], [], []>} : vector<16x16xf32>, vector<16x5xf32>, vector<16x5xf32> -> vector<16x5xf32>
    %24 = arith.addf %17, %21 : vector<16x160xf32>
    %25 = arith.addf %18, %23 : vector<16x5xf32>
    %c0_27 = arith.constant 0 : index
    %c0_28 = arith.constant 0 : index
    %26 = vector.load %arg5[%c0_27, %c0_28] : memref<16x6xf32, #tpu.memory_space<vmem>>, vector<16x6xf32>
    %c56 = arith.constant 56 : index
    %c0_29 = arith.constant 0 : index
    %27 = vector.load %arg6[%c56, %c0_29] : memref<62x160xf32, #tpu.memory_space<vmem>>, vector<6x160xf32>
    %cst_30 = arith.constant dense<0.000000e+00> : vector<16x160xf32>
    %28 = tpu.matmul %26, %27, %cst_30 {dimension_numbers = #tpu.dot_dimension_numbers<[1], [0], [0], [1], [0, 0, 1, 1], [], []>} : vector<16x6xf32>, vector<6x160xf32>, vector<16x160xf32> -> vector<16x160xf32>
    %c56_31 = arith.constant 56 : index
    %c0_32 = arith.constant 0 : index
    %29 = vector.load %arg7[%c56_31, %c0_32] : memref<62x5xf32, #tpu.memory_space<vmem>>, vector<6x5xf32>
    %cst_33 = arith.constant dense<0.000000e+00> : vector<16x5xf32>
    %30 = tpu.matmul %26, %29, %cst_33 {dimension_numbers = #tpu.dot_dimension_numbers<[1], [0], [0], [1], [0, 0, 1, 1], [], []>} : vector<16x6xf32>, vector<6x5xf32>, vector<16x5xf32> -> vector<16x5xf32>
    %31 = arith.addf %24, %28 : vector<16x160xf32>
    %32 = arith.addf %25, %30 : vector<16x5xf32>
    %cst_34 = arith.constant 0.000000e+00 : f32
    %33 = vector.broadcast %cst_34 : f32 to vector<16x5xf32>
    %34 = arith.cmpf one, %32, %33 : vector<16x5xf32>
    %cst_35 = arith.constant 1.000000e+00 : f32
    %35 = vector.broadcast %cst_35 : f32 to vector<16x5xf32>
    %36 = arith.select %34, %32, %35 : vector<16x5xi1>, vector<16x5xf32>
    %37 = tpu.iota {dimensions = array<i32: 1>} : vector<16x5xi32>
    %c1_i32 = arith.constant 1 : i32
    %38 = vector.broadcast %c1_i32 : i32 to vector<16x5xi32>
    %39 = arith.cmpi eq, %37, %38 : vector<16x5xi32>
    %cst_36 = arith.constant 1.000000e+00 : f32
    %40 = vector.broadcast %cst_36 : f32 to vector<16x5xf32>
    %41 = arith.select %39, %40, %36 : vector<16x5xi1>, vector<16x5xf32>
    %c0_i32 = arith.constant 0 : i32
    %42 = vector.broadcast %c0_i32 : i32 to vector<16x5xi32>
    %43 = arith.cmpi eq, %37, %42 : vector<16x5xi32>
    %44 = vector.extract_strided_slice %36 {offsets = [0, 1], sizes = [16, 1], strides = [1, 1]} : vector<16x5xf32> to vector<16x1xf32>
    %cst_37 = arith.constant 1.000000e+00 : f32
    %45 = vector.shape_cast %44 : vector<16x1xf32> to vector<16x1xf32>
    %46 = vector.broadcast %45 : vector<16x1xf32> to vector<16x5xf32>
    %47 = vector.broadcast %cst_37 : f32 to vector<16x5xf32>
    %48 = arith.select %43, %46, %47 : vector<16x5xi1>, vector<16x5xf32>
    %49 = arith.mulf %41, %48 : vector<16x5xf32>
    %50 = tpu.reciprocal %49 {approx = true} : vector<16x5xf32> -> vector<16x5xf32>
    %51 = arith.mulf %49, %50 : vector<16x5xf32>
    %cst_38 = arith.constant 2.000000e+00 : f32
    %52 = vector.broadcast %cst_38 : f32 to vector<16x5xf32>
    %53 = arith.subf %52, %51 : vector<16x5xf32>
    %54 = arith.mulf %50, %53 : vector<16x5xf32>
    %c0_39 = arith.constant 0 : index
    %c0_40 = arith.constant 0 : index
    %55 = vector.load %arg8[%c0_39, %c0_40] : memref<5x160xf32, #tpu.memory_space<vmem>>, vector<5x160xf32>
    %cst_41 = arith.constant dense<0.000000e+00> : vector<16x160xf32>
    %56 = tpu.matmul %54, %55, %cst_41 {dimension_numbers = #tpu.dot_dimension_numbers<[1], [0], [0], [1], [0, 0, 1, 1], [], []>} : vector<16x5xf32>, vector<5x160xf32>, vector<16x160xf32> -> vector<16x160xf32>
    %57 = arith.mulf %31, %56 : vector<16x160xf32>
    %c0_42 = arith.constant 0 : index
    %c0_43 = arith.constant 0 : index
    %58 = vector.load %arg9[%c0_42, %c0_43] : memref<16x160xf32, #tpu.memory_space<vmem>>, vector<16x160xf32>
    tpu.vector_store %arg9[%c0_42, %c0_43], %57 {strides = array<i32>} : memref<16x160xf32, #tpu.memory_space<vmem>>, vector<16x160xf32>,
    return
  }
  func.func @transform_0(%arg0: i32) -> (i32, i32) {
    %c0_i32 = arith.constant 0 : i32
    %c0_i32_0 = arith.constant 0 : i32
    return %arg0, %c0_i32 : i32, i32
  }
  func.func @transform_1(%arg0: i32) -> (i32, i32) {
    %c0_i32 = arith.constant 0 : i32
    %c0_i32_0 = arith.constant 0 : i32
    return %arg0, %c0_i32 : i32, i32
  }
  func.func @transform_2(%arg0: i32) -> (i32, i32) {
    %c0_i32 = arith.constant 0 : i32
    %c0_i32_0 = arith.constant 0 : i32
    return %arg0, %c0_i32 : i32, i32
  }
  func.func @transform_3(%arg0: i32) -> (i32, i32) {
    %c0_i32 = arith.constant 0 : i32
    %c0_i32_0 = arith.constant 0 : i32
    return %arg0, %c0_i32 : i32, i32
  }
  func.func @transform_4(%arg0: i32) -> (i32, i32) {
    %c0_i32 = arith.constant 0 : i32
    %c0_i32_0 = arith.constant 0 : i32
    return %arg0, %c0_i32 : i32, i32
  }
  func.func @transform_5(%arg0: i32) -> (i32, i32) {
    %c0_i32 = arith.constant 0 : i32
    %c0_i32_0 = arith.constant 0 : i32
    %c0_i32_1 = arith.constant 0 : i32
    return %c0_i32, %c0_i32_0 : i32, i32
  }
  func.func @transform_6(%arg0: i32) -> (i32, i32) {
    %c0_i32 = arith.constant 0 : i32
    %c0_i32_0 = arith.constant 0 : i32
    %c0_i32_1 = arith.constant 0 : i32
    return %c0_i32, %c0_i32_0 : i32, i32
  }
  func.func @transform_7(%arg0: i32) -> (i32, i32) {
    %c0_i32 = arith.constant 0 : i32
    %c0_i32_0 = arith.constant 0 : i32
    %c0_i32_1 = arith.constant 0 : i32
    return %c0_i32, %c0_i32_0 : i32, i32
  }
  func.func @transform_8(%arg0: i32) -> (i32, i32) {
    %c0_i32 = arith.constant 0 : i32
    %c0_i32_0 = arith.constant 0 : i32
    return %arg0, %c0_i32 : i32, i32
  }
}

</mosaic_0001>

<llo_original>
// kernel: tpu_custom_call.1
$region0: #{tpu_custom_call.1}
  #allocation0 [shape = 'u32[]', space=smem, size = 0x4, offset = 0x4, fixed_abs, tag = 'smem constant byte address 0x4 - core index']
  #allocation1 [shape = 'u32[144,128]{1,0:T(1,128)}', space=vmem, size = 0x12000, scoped, tag = 'internal scratch']
  %s0 = inlined_call_operand.vmem [shape: f32[24,12], index: 0, kind: input, shape index: {}]
  %s1 = inlined_call_operand.vmem [shape: f32[24,20], index: 1, kind: input, shape index: {}]
  %s2 = inlined_call_operand.vmem [shape: f32[24,8], index: 2, kind: input, shape index: {}]
  %s3 = inlined_call_operand.vmem [shape: f32[24,16], index: 3, kind: input, shape index: {}]
  %s4 = inlined_call_operand.vmem [shape: f32[24,6], index: 4, kind: input, shape index: {}]
  %s5 = inlined_call_operand.vmem [shape: f32[62,160], index: 5, kind: input, shape index: {}]
  %s6 = inlined_call_operand.vmem [shape: f32[62,5], index: 6, kind: input, shape index: {}]
  %s7 = inlined_call_operand.vmem [shape: f32[5,160], index: 7, kind: input, shape index: {}]
  %s8 = inlined_call_operand.hbm [shape: f32[24,160], index: 8, kind: output, shape index: {}]
  %s9 = sld [smem:[#allocation0]]
  $region65: #{tpu_custom_call.1} parent=0
    _
  %s11 = ssub.s32 1, %s9
  %s12 = scalar_select 0, %s11, %s9
  $region1: #{tpu_custom_call.1} parent=0
    #allocation2 [shape = 'u8[32768]{0}', space=vmem, size = 0x8000, scoped, tag = 'output window, operand 0']
    #allocation3 [shape = 's32[2]{0}', space=sflag, size = 0x8, scoped, tag = 'scoped memory for tpu_custom_call.1']
    %13 = vsyncpa [#allocation3], 0
    %s14 = scalar_lea.sflag [#allocation3], 1
    %15 = vsyncpa %s14, 0
    loop: start=0, step=1, limit=4
    $region2: #{tpu_custom_call.1} parent=1 // loop_pre_header
      _
    $region3: #{tpu_custom_call.1} parent=1 // loop_header
      %s17 = sphi 0, %s21
      %p18 = scmp.ge.s32.totalorder %s17, 4
      %s27 = sphi 0, %s29
      %s30 = sphi 0, %s27
      %s31 = sphi 0, %s30
      %s47 = sphi 0, %s31
      %s53 = sphi 0, %s55
      %s56 = sphi 0, %s53
      %s57 = sphi 0, %s56
      %s73 = sphi 0, %s57
      %s79 = sphi 0, %s81
      %s82 = sphi 0, %s79
      %s83 = sphi 0, %s82
      %s99 = sphi 0, %s83
      %s105 = sphi 0, %s107
      %s108 = sphi 0, %s105
      %s109 = sphi 0, %s108
      %s125 = sphi 0, %s109
      %s131 = sphi 0, %s133
      %s134 = sphi 0, %s131
      %s135 = sphi 0, %s134
      %s151 = sphi 0, %s135
      %s155 = sphi 0, %s155
      %s157 = sphi 0, %s155
      %s158 = sphi 0, %s157
      %s172 = sphi 0, %s158
      %s176 = sphi 0, %s176
      %s178 = sphi 0, %s176
      %s179 = sphi 0, %s178
      %s193 = sphi 0, %s179
      %s197 = sphi 0, %s197
      %s199 = sphi 0, %s197
      %s200 = sphi 0, %s199
      %s214 = sphi 0, %s200
      %s220 = sphi 0, %s222
      %s223 = sphi 0, %s220
      %s224 = sphi 0, %s223
      %s240 = sphi 0, %s224
    $region4: #{tpu_custom_call.1} parent=1 // loop_header_branch
      %20 = sbr.rel (%p18) target = $region8
    $region5: #{tpu_custom_call.1} parent=1 // loop_body
      %s22 = ssub.s32 %s17, 1
      %s23 = ssub.s32 %s17, 2
      %s24 = sadd.s32 %s17, 1
      %s25 = ssub.s32 %s17, %s24
      %p26 = scmp.eq.s32.totalorder %s25, 0
      %s28 = sadd.s32 %s27, 1
      %s29 = scalar_select %p26, %s27, %s28
      %p32 = pneg %p26
      %p33 = scmp.eq.s32.totalorder %s17, 1
      %p34 = por %p32, %p33
      %p35 = scmp.ne.s32.totalorder %s27, %s30
      %p36 = scmp.eq.s32.totalorder %s17, 0
      %p37 = por %p35, %p36
      %p38 = scmp.ne.s32.totalorder %s27, %s30
      %p39 = scmp.eq.s32.totalorder %s22, 1
      %p40 = por %p38, %p39
      %p41 = scmp.ne.s32.totalorder %s30, %s31
      %p42 = scmp.eq.s32.totalorder %s22, 0
      %p43 = por %p41, %p42
      %p44 = scmp.ne.s32.totalorder %s30, %s31
      %p45 = scmp.eq.s32.totalorder %s23, 1
      %p46 = por %p44, %p45
      %p48 = scmp.ne.s32.totalorder %s31, %s47
      %p49 = scmp.eq.s32.totalorder %s23, 0
      %p50 = por %p48, %p49
      %s51 = ssub.s32 %s17, %s24
      %p52 = scmp.eq.s32.totalorder %s51, 0
      %s54 = sadd.s32 %s53, 1
      %s55 = scalar_select %p52, %s53, %s54
      %p58 = pneg %p52
      %p59 = scmp.eq.s32.totalorder %s17, 1
      %p60 = por %p58, %p59
      %p61 = scmp.ne.s32.totalorder %s53, %s56
      %p62 = scmp.eq.s32.totalorder %s17, 0
      %p63 = por %p61, %p62
      %p64 = scmp.ne.s32.totalorder %s53, %s56
      %p65 = scmp.eq.s32.totalorder %s22, 1
      %p66 = por %p64, %p65
      %p67 = scmp.ne.s32.totalorder %s56, %s57
      %p68 = scmp.eq.s32.totalorder %s22, 0
      %p69 = por %p67, %p68
      %p70 = scmp.ne.s32.totalorder %s56, %s57
      %p71 = scmp.eq.s32.totalorder %s23, 1
      %p72 = por %p70, %p71
      %p74 = scmp.ne.s32.totalorder %s57, %s73
      %p75 = scmp.eq.s32.totalorder %s23, 0
      %p76 = por %p74, %p75
      %s77 = ssub.s32 %s17, %s24
      %p78 = scmp.eq.s32.totalorder %s77, 0
      %s80 = sadd.s32 %s79, 1
      %s81 = scalar_select %p78, %s79, %s80
      %p84 = pneg %p78
      %p85 = scmp.eq.s32.totalorder %s17, 1
      %p86 = por %p84, %p85
      %p87 = scmp.ne.s32.totalorder %s79, %s82
      %p88 = scmp.eq.s32.totalorder %s17, 0
      %p89 = por %p87, %p88
      %p90 = scmp.ne.s32.totalorder %s79, %s82
      %p91 = scmp.eq.s32.totalorder %s22, 1
      %p92 = por %p90, %p91
      %p93 = scmp.ne.s32.totalorder %s82, %s83
      %p94 = scmp.eq.s32.totalorder %s22, 0
      %p95 = por %p93, %p94
      %p96 = scmp.ne.s32.totalorder %s82, %s83
      %p97 = scmp.eq.s32.totalorder %s23, 1
      %p98 = por %p96, %p97
      %p100 = scmp.ne.s32.totalorder %s83, %s99
      %p101 = scmp.eq.s32.totalorder %s23, 0
      %p102 = por %p100, %p101
      %s103 = ssub.s32 %s17, %s24
      %p104 = scmp.eq.s32.totalorder %s103, 0
      %s106 = sadd.s32 %s105, 1
      %s107 = scalar_select %p104, %s105, %s106
      %p110 = pneg %p104
      %p111 = scmp.eq.s32.totalorder %s17, 1
      %p112 = por %p110, %p111
      %p113 = scmp.ne.s32.totalorder %s105, %s108
      %p114 = scmp.eq.s32.totalorder %s17, 0
      %p115 = por %p113, %p114
      %p116 = scmp.ne.s32.totalorder %s105, %s108
      %p117 = scmp.eq.s32.totalorder %s22, 1
      %p118 = por %p116, %p117
      %p119 = scmp.ne.s32.totalorder %s108, %s109
      %p120 = scmp.eq.s32.totalorder %s22, 0
      %p121 = por %p119, %p120
      %p122 = scmp.ne.s32.totalorder %s108, %s109
      %p123 = scmp.eq.s32.totalorder %s23, 1
      %p124 = por %p122, %p123
      %p126 = scmp.ne.s32.totalorder %s109, %s125
      %p127 = scmp.eq.s32.totalorder %s23, 0
      %p128 = por %p126, %p127
      %s129 = ssub.s32 %s17, %s24
      %p130 = scmp.eq.s32.totalorder %s129, 0
      %s132 = sadd.s32 %s131, 1
      %s133 = scalar_select %p130, %s131, %s132
      %p136 = pneg %p130
      %p137 = scmp.eq.s32.totalorder %s17, 1
      %p138 = por %p136, %p137
      %p139 = scmp.ne.s32.totalorder %s131, %s134
      %p140 = scmp.eq.s32.totalorder %s17, 0
      %p141 = por %p139, %p140
      %p142 = scmp.ne.s32.totalorder %s131, %s134
      %p143 = scmp.eq.s32.totalorder %s22, 1
      %p144 = por %p142, %p143
      %p145 = scmp.ne.s32.totalorder %s134, %s135
      %p146 = scmp.eq.s32.totalorder %s22, 0
      %p147 = por %p145, %p146
      %p148 = scmp.ne.s32.totalorder %s134, %s135
      %p149 = scmp.eq.s32.totalorder %s23, 1
      %p150 = por %p148, %p149
      %p152 = scmp.ne.s32.totalorder %s135, %s151
      %p153 = scmp.eq.s32.totalorder %s23, 0
      %p154 = por %p152, %p153
      %s156 = sadd.s32 %s155, 1
      %p159 = scmp.eq.s32.totalorder %s17, 1
      %p160 = scmp.ne.s32.totalorder %s155, %s157
      %p161 = scmp.eq.s32.totalorder %s17, 0
      %p162 = por %p160, %p161
      %p163 = scmp.ne.s32.totalorder %s155, %s157
      %p164 = scmp.eq.s32.totalorder %s22, 1
      %p165 = por %p163, %p164
      %p166 = scmp.ne.s32.totalorder %s157, %s158
      %p167 = scmp.eq.s32.totalorder %s22, 0
      %p168 = por %p166, %p167
      %p169 = scmp.ne.s32.totalorder %s157, %s158
      %p170 = scmp.eq.s32.totalorder %s23, 1
      %p171 = por %p169, %p170
      %p173 = scmp.ne.s32.totalorder %s158, %s172
      %p174 = scmp.eq.s32.totalorder %s23, 0
      %p175 = por %p173, %p174
      %s177 = sadd.s32 %s176, 1
      %p180 = scmp.eq.s32.totalorder %s17, 1
      %p181 = scmp.ne.s32.totalorder %s176, %s178
      %p182 = scmp.eq.s32.totalorder %s17, 0
      %p183 = por %p181, %p182
      %p184 = scmp.ne.s32.totalorder %s176, %s178
      %p185 = scmp.eq.s32.totalorder %s22, 1
      %p186 = por %p184, %p185
      %p187 = scmp.ne.s32.totalorder %s178, %s179
      %p188 = scmp.eq.s32.totalorder %s22, 0
      %p189 = por %p187, %p188
      %p190 = scmp.ne.s32.totalorder %s178, %s179
      %p191 = scmp.eq.s32.totalorder %s23, 1
      %p192 = por %p190, %p191
      %p194 = scmp.ne.s32.totalorder %s179, %s193
      %p195 = scmp.eq.s32.totalorder %s23, 0
      %p196 = por %p194, %p195
      %s198 = sadd.s32 %s197, 1
      %p201 = scmp.eq.s32.totalorder %s17, 1
      %p202 = scmp.ne.s32.totalorder %s197, %s199
      %p203 = scmp.eq.s32.totalorder %s17, 0
      %p204 = por %p202, %p203
      %p205 = scmp.ne.s32.totalorder %s197, %s199
      %p206 = scmp.eq.s32.totalorder %s22, 1
      %p207 = por %p205, %p206
      %p208 = scmp.ne.s32.totalorder %s199, %s200
      %p209 = scmp.eq.s32.totalorder %s22, 0
      %p210 = por %p208, %p209
      %p211 = scmp.ne.s32.totalorder %s199, %s200
      %p212 = scmp.eq.s32.totalorder %s23, 1
      %p213 = por %p211, %p212
      %p215 = scmp.ne.s32.totalorder %s200, %s214
      %p216 = scmp.eq.s32.totalorder %s23, 0
      %p217 = por %p215, %p216
      %s218 = ssub.s32 %s17, %s24
      %p219 = scmp.eq.s32.totalorder %s218, 0
      %s221 = sadd.s32 %s220, 1
      %s222 = scalar_select %p219, %s220, %s221
      %p225 = pneg %p219
      %p226 = scmp.eq.s32.totalorder %s17, 1
      %p227 = por %p225, %p226
      %p228 = scmp.ne.s32.totalorder %s220, %s223
      %p229 = scmp.eq.s32.totalorder %s17, 0
      %p230 = por %p228, %p229
      %p231 = scmp.ne.s32.totalorder %s220, %s223
      %p232 = scmp.eq.s32.totalorder %s22, 1
      %p233 = por %p231, %p232
      %p234 = scmp.ne.s32.totalorder %s223, %s224
      %p235 = scmp.eq.s32.totalorder %s22, 0
      %p236 = por %p234, %p235
      %p237 = scmp.ne.s32.totalorder %s223, %s224
      %p238 = scmp.eq.s32.totalorder %s23, 1
      %p239 = por %p237, %p238
      %p241 = scmp.ne.s32.totalorder %s224, %s240
      %p242 = scmp.eq.s32.totalorder %s23, 0
      %p243 = por %p241, %p242
      %p244 = scmp.le.s32.totalorder 1, %s17
      %p245 = scmp.lt.s32.totalorder %s17, 3
      %p246 = pnand %p244, %p245
      %p247 = pneg %p246
      // Predicated region
      $region9: #{tpu_custom_call.1} parent=5 // pred_check
        _
      $region10: #{tpu_custom_call.1} parent=5 // pred_check_branch
        %249 = sbr.rel (%p246) target = $region12
      $region11: #{tpu_custom_call.1} parent=5 // pred_region
        %s250 = ssub.s32 %s17, 1
        // Predicated region
        $region13: #{tpu_custom_call.1} parent=11 // pred_check
          %p251 = pneg %p168
        $region14: #{tpu_custom_call.1} parent=11 // pred_check_branch
          %253 = sbr.rel (%p251) target = $region16
        $region15: #{tpu_custom_call.1} parent=11 // pred_region
          _
        $region16: #{tpu_custom_call.1} parent=11 // pred_fallthru
          _
        // Predicated region
        $region17: #{tpu_custom_call.1} parent=11 // pred_check
          %p254 = pneg %p189
        $region18: #{tpu_custom_call.1} parent=11 // pred_check_branch
          %256 = sbr.rel (%p254) target = $region20
        $region19: #{tpu_custom_call.1} parent=11 // pred_region
          _
        $region20: #{tpu_custom_call.1} parent=11 // pred_fallthru
          _
        // Predicated region
        $region21: #{tpu_custom_call.1} parent=11 // pred_check
          %p257 = pneg %p210
        $region22: #{tpu_custom_call.1} parent=11 // pred_check_branch
          %259 = sbr.rel (%p257) target = $region24
        $region23: #{tpu_custom_call.1} parent=11 // pred_region
          _
        $region24: #{tpu_custom_call.1} parent=11 // pred_fallthru
          _
      $region12: #{tpu_custom_call.1} parent=5 // pred_fallthru
        _
      %p260 = scmp.lt.s32.totalorder %s17, 2
      // Predicated region
      $region25: #{tpu_custom_call.1} parent=5 // pred_check
        %p261 = pneg %p260
      $region26: #{tpu_custom_call.1} parent=5 // pred_check_branch
        %263 = sbr.rel (%p261) target = $region28
      $region27: #{tpu_custom_call.1} parent=5 // pred_region
        // Predicated region
        $region29: #{tpu_custom_call.1} parent=27 // pred_check
          %p264 = pneg %p37
        $region30: #{tpu_custom_call.1} parent=27 // pred_check_branch
          %266 = sbr.rel (%p264) target = $region32
        $region31: #{tpu_custom_call.1} parent=27 // pred_region
          %s267 = smul.u32 2, %s17
          %s268 = ssub.s32 3, %s267
          %p269 = scmp.lt.s32.totalorder %s268, 2
          %s270 = scalar_select %p269, %s268, 2
          %s271 = smul.u32 128, %s270
          %p272 = scmp.lt.s32.totalorder %s267, 2
          %s273 = scalar_select %p272, %s267, 2
          %s274 = smul.addr %s273, 8
          %s275 = scalar_lea.vmem %s0, %s274
          %s276 = smul.u32 2, %s17
          %s277 = ssub.s32 3, %s276
          %p278 = scmp.lt.s32.totalorder %s277, 2
          %s279 = scalar_select %p278, %s277, 2
          %s280 = smul.u32 128, %s279
        $region32: #{tpu_custom_call.1} parent=27 // pred_fallthru
          _
        // Predicated region
        $region33: #{tpu_custom_call.1} parent=27 // pred_check
          %p281 = pneg %p63
        $region34: #{tpu_custom_call.1} parent=27 // pred_check_branch
          %283 = sbr.rel (%p281) target = $region36
        $region35: #{tpu_custom_call.1} parent=27 // pred_region
          %s284 = smul.u32 2, %s17
          %s285 = ssub.s32 3, %s284
          %p286 = scmp.lt.s32.totalorder %s285, 2
          %s287 = scalar_select %p286, %s285, 2
          %s288 = smul.u32 128, %s287
          %p289 = scmp.lt.s32.totalorder %s284, 2
          %s290 = scalar_select %p289, %s284, 2
          %s291 = smul.addr %s290, 8
          %s292 = scalar_lea.vmem %s1, %s291
          %s293 = smul.u32 2, %s17
          %s294 = ssub.s32 3, %s293
          %p295 = scmp.lt.s32.totalorder %s294, 2
          %s296 = scalar_select %p295, %s294, 2
          %s297 = smul.u32 128, %s296
        $region36: #{tpu_custom_call.1} parent=27 // pred_fallthru
          _
        // Predicated region
        $region37: #{tpu_custom_call.1} parent=27 // pred_check
          %p298 = pneg %p89
        $region38: #{tpu_custom_call.1} parent=27 // pred_check_branch
          %300 = sbr.rel (%p298) target = $region40
        $region39: #{tpu_custom_call.1} parent=27 // pred_region
          %s301 = smul.u32 2, %s17
          %s302 = ssub.s32 3, %s301
          %p303 = scmp.lt.s32.totalorder %s302, 2
          %s304 = scalar_select %p303, %s302, 2
          %s305 = smul.u32 128, %s304
          %p306 = scmp.lt.s32.totalorder %s301, 2
          %s307 = scalar_select %p306, %s301, 2
          %s308 = smul.addr %s307, 8
          %s309 = scalar_lea.vmem %s2, %s308
          %s310 = smul.u32 2, %s17
          %s311 = ssub.s32 3, %s310
          %p312 = scmp.lt.s32.totalorder %s311, 2
          %s313 = scalar_select %p312, %s311, 2
          %s314 = smul.u32 128, %s313
        $region40: #{tpu_custom_call.1} parent=27 // pred_fallthru
          _
        // Predicated region
        $region41: #{tpu_custom_call.1} parent=27 // pred_check
          %p315 = pneg %p115
        $region42: #{tpu_custom_call.1} parent=27 // pred_check_branch
          %317 = sbr.rel (%p315) target = $region44
        $region43: #{tpu_custom_call.1} parent=27 // pred_region
          %s318 = smul.u32 2, %s17
          %s319 = ssub.s32 3, %s318
          %p320 = scmp.lt.s32.totalorder %s319, 2
          %s321 = scalar_select %p320, %s319, 2
          %s322 = smul.u32 128, %s321
          %p323 = scmp.lt.s32.totalorder %s318, 2
          %s324 = scalar_select %p323, %s318, 2
          %s325 = smul.addr %s324, 8
          %s326 = scalar_lea.vmem %s3, %s325
          %s327 = smul.u32 2, %s17
          %s328 = ssub.s32 3, %s327
          %p329 = scmp.lt.s32.totalorder %s328, 2
          %s330 = scalar_select %p329, %s328, 2
          %s331 = smul.u32 128, %s330
        $region44: #{tpu_custom_call.1} parent=27 // pred_fallthru
          _
        // Predicated region
        $region45: #{tpu_custom_call.1} parent=27 // pred_check
          %p332 = pneg %p141
        $region46: #{tpu_custom_call.1} parent=27 // pred_check_branch
          %334 = sbr.rel (%p332) target = $region48
        $region47: #{tpu_custom_call.1} parent=27 // pred_region
          %s335 = smul.u32 2, %s17
          %s336 = ssub.s32 3, %s335
          %p337 = scmp.lt.s32.totalorder %s336, 2
          %s338 = scalar_select %p337, %s336, 2
          %s339 = smul.u32 128, %s338
          %p340 = scmp.lt.s32.totalorder %s335, 2
          %s341 = scalar_select %p340, %s335, 2
          %s342 = smul.addr %s341, 8
          %s343 = scalar_lea.vmem %s4, %s342
          %s344 = smul.u32 2, %s17
          %s345 = ssub.s32 3, %s344
          %p346 = scmp.lt.s32.totalorder %s345, 2
          %s347 = scalar_select %p346, %s345, 2
          %s348 = smul.u32 128, %s347
        $region48: #{tpu_custom_call.1} parent=27 // pred_fallthru
          _
      $region28: #{tpu_custom_call.1} parent=5 // pred_fallthru
        _
      %p349 = scmp.le.s32.totalorder 1, %s17
      %p350 = scmp.lt.s32.totalorder %s17, 3
      %p351 = pnand %p349, %p350
      %p352 = pneg %p351
      // Predicated region
      $region49: #{tpu_custom_call.1} parent=5 // pred_check
        _
      $region50: #{tpu_custom_call.1} parent=5 // pred_check_branch
        %354 = sbr.rel (%p351) target = $region52
      $region51: #{tpu_custom_call.1} parent=5 // pred_region
        %s355 = ssub.s32 %s17, 1
        %s356 = smul.u32 2, %s22
        %s357 = ssub.s32 3, %s356
        %p358 = scmp.lt.s32.totalorder %s357, 2
        %s359 = scalar_select %p358, %s357, 2
        %s360 = smul.u32 128, %s359
        %p361 = scmp.lt.s32.totalorder %s356, 2
        %s362 = scalar_select %p361, %s356, 2
        %s363 = smul.addr %s362, 8
        %s364 = scalar_lea.vmem %s0, %s363
        %p365 = pneg %p43
        %p366 = pneg %p40
        %s367 = smul.u32 2, %s22
        %s368 = ssub.s32 3, %s367
        %p369 = scmp.lt.s32.totalorder %s368, 2
        %s370 = scalar_select %p369, %s368, 2
        %s371 = smul.u32 128, %s370
        %p372 = scmp.lt.s32.totalorder %s367, 2
        %s373 = scalar_select %p372, %s367, 2
        %s374 = smul.addr %s373, 8
        %s375 = scalar_lea.vmem %s1, %s374
        %p376 = pneg %p69
        %p377 = pneg %p66
        %s378 = smul.u32 2, %s22
        %s379 = ssub.s32 3, %s378
        %p380 = scmp.lt.s32.totalorder %s379, 2
        %s381 = scalar_select %p380, %s379, 2
        %s382 = smul.u32 128, %s381
        %p383 = scmp.lt.s32.totalorder %s378, 2
        %s384 = scalar_select %p383, %s378, 2
        %s385 = smul.addr %s384, 8
        %s386 = scalar_lea.vmem %s2, %s385
        %p387 = pneg %p95
        %p388 = pneg %p92
        %s389 = smul.u32 2, %s22
        %s390 = ssub.s32 3, %s389
        %p391 = scmp.lt.s32.totalorder %s390, 2
        %s392 = scalar_select %p391, %s390, 2
        %s393 = smul.u32 128, %s392
        %p394 = scmp.lt.s32.totalorder %s389, 2
        %s395 = scalar_select %p394, %s389, 2
        %s396 = smul.addr %s395, 8
        %s397 = scalar_lea.vmem %s3, %s396
        %p398 = pneg %p121
        %p399 = pneg %p118
        %s400 = smul.u32 2, %s22
        %s401 = ssub.s32 3, %s400
        %p402 = scmp.lt.s32.totalorder %s401, 2
        %s403 = scalar_select %p402, %s401, 2
        %s404 = smul.u32 128, %s403
        %p405 = scmp.lt.s32.totalorder %s400, 2
        %s406 = scalar_select %p405, %s400, 2
        %s407 = smul.addr %s406, 8
        %s408 = scalar_lea.vmem %s4, %s407
        %p409 = pneg %p147
        %p410 = pneg %p144
        %p411 = pneg %p168
        %p412 = pneg %p165
        %p413 = pneg %p189
        %p414 = pneg %p186
        %p415 = pneg %p210
        %p416 = pneg %p207
        %p417 = pneg %p236
        %p418 = pneg %p233
        %s419 = sand.u32 %s223, 1
        %s420 = scalar_lea.sflag [#allocation3], %s419
        %s421 = sand.u32 %s223, 1
        %s422 = smul.addr %s421, 32
        %s423 = scalar_lea.vmem [#allocation2], %s422
        %s424 = smul.u32 2, %s22
        %s425 = ssub.s32 3, %s424
        %p426 = scmp.lt.s32.totalorder %s425, 2
        %s427 = scalar_select %p426, %s425, 2
        %s428 = smul.u32 128, %s427
        %p429 = scmp.lt.s32.totalorder %s424, 2
        %s430 = scalar_select %p429, %s424, 2
        %s431 = smul.addr %s430, 8
        %s432 = scalar_lea.vmem %s0, %s431
        %s433 = smul.u32 2, %s22
        %s434 = ssub.s32 3, %s433
        %p435 = scmp.lt.s32.totalorder %s434, 2
        %s436 = scalar_select %p435, %s434, 2
        %s437 = smul.u32 128, %s436
        %s438 = smul.u32 2, %s22
        %s439 = ssub.s32 3, %s438
        %p440 = scmp.lt.s32.totalorder %s439, 2
        %s441 = scalar_select %p440, %s439, 2
        %s442 = smul.u32 128, %s441
        %p443 = scmp.lt.s32.totalorder %s438, 2
        %s444 = scalar_select %p443, %s438, 2
        %s445 = smul.addr %s444, 8
        %s446 = scalar_lea.vmem %s1, %s445
        %s447 = smul.u32 2, %s22
        %s448 = ssub.s32 3, %s447
        %p449 = scmp.lt.s32.totalorder %s448, 2
        %s450 = scalar_select %p449, %s448, 2
        %s451 = smul.u32 128, %s450
        %s452 = smul.u32 2, %s22
        %s453 = ssub.s32 3, %s452
        %p454 = scmp.lt.s32.totalorder %s453, 2
        %s455 = scalar_select %p454, %s453, 2
        %s456 = smul.u32 128, %s455
        %p457 = scmp.lt.s32.totalorder %s452, 2
        %s458 = scalar_select %p457, %s452, 2
        %s459 = smul.addr %s458, 8
        %s460 = scalar_lea.vmem %s2, %s459
        %s461 = smul.u32 2, %s22
        %s462 = ssub.s32 3, %s461
        %p463 = scmp.lt.s32.totalorder %s462, 2
        %s464 = scalar_select %p463, %s462, 2
        %s465 = smul.u32 128, %s464
        %s466 = smul.u32 2, %s22
        %s467 = ssub.s32 3, %s466
        %p468 = scmp.lt.s32.totalorder %s467, 2
        %s469 = scalar_select %p468, %s467, 2
        %s470 = smul.u32 128, %s469
        %p471 = scmp.lt.s32.totalorder %s466, 2
        %s472 = scalar_select %p471, %s466, 2
        %s473 = smul.addr %s472, 8
        %s474 = scalar_lea.vmem %s3, %s473
        %s475 = smul.u32 2, %s22
        %s476 = ssub.s32 3, %s475
        %p477 = scmp.lt.s32.totalorder %s476, 2
        %s478 = scalar_select %p477, %s476, 2
        %s479 = smul.u32 128, %s478
        %s480 = smul.u32 2, %s22
        %s481 = ssub.s32 3, %s480
        %p482 = scmp.lt.s32.totalorder %s481, 2
        %s483 = scalar_select %p482, %s481, 2
        %s484 = smul.u32 128, %s483
        %p485 = scmp.lt.s32.totalorder %s480, 2
        %s486 = scalar_select %p485, %s480, 2
        %s487 = smul.addr %s486, 8
        %s488 = scalar_lea.vmem %s4, %s487
        %s489 = smul.u32 2, %s22
        %s490 = ssub.s32 3, %s489
        %p491 = scmp.lt.s32.totalorder %s490, 2
        %s492 = scalar_select %p491, %s490, 2
        %s493 = smul.u32 128, %s492
        %s494 = smul.u32 2, %s22
        %s495 = ssub.s32 3, %s494
        %p496 = scmp.lt.s32.totalorder %s495, 2
        %s497 = scalar_select %p496, %s495, 2
        %s498 = smul.u32 128, %s497
        %s499 = smul.u32 %s498, 2
        %v500 = vld [vmem:[%s432] sm:$0xff]
        %v501 = vld [vmem:[%s432 + $0x8] sm:$0xff]
        %v502 = vld [vmem:[%s5] sm:$0xff]
        %v503 = vld [vmem:[%s5 + $0x8] sm:$0xff]
        %v504 = vld [vmem:[%s5 + $0x10] sm:$0xf]
        %v505 = vld [vmem:[%s5 + $0x18] sm:$0xf]
        %v506 = vld [vmem:[%s6] sm:$0xff]
        %v507 = vld [vmem:[%s6 + $0x8] sm:$0xf]
        %v508 = vld [vmem:[%s446] sm:$0xff]
        %v509 = vld [vmem:[%s446 + $0x8] sm:$0xff]
        %v510 = vld [vmem:[%s5 + $0x10] sm:$0xf0]
        %v511 = vld [vmem:[%s5 + $0x18] sm:$0xf0]
        %v512 = vld [vmem:[%s5 + $0x20] sm:$0xff]
        %v513 = vld [vmem:[%s5 + $0x28] sm:$0xff]
        %v514 = vld [vmem:[%s5 + $0x30] sm:$0xff]
        %v515 = vld [vmem:[%s5 + $0x38] sm:$0xff]
        %vm522 = vcmask 1043456
        %v523 = vrot.slane %v510, 4
        %v524 = vrot.slane %v512, 4
        %v525 = vsel %vm522, %v523, %v524
        %v526 = vrot.slane %v511, 4
        %v527 = vrot.slane %v513, 4
        %v528 = vsel %vm522, %v526, %v527
        %v529 = vrot.slane %v514, 4
        %v530 = vsel %vm522, %v524, %v529
        %v531 = vrot.slane %v515, 4
        %v532 = vsel %vm522, %v527, %v531
        %vm537 = vcmask 162816
        %v539 = vsel %vm537, %v508, 0
        %v542 = vsel %vm537, %v509, 0
        %v544 = vsel %vm522, %v529, 0
        %v546 = vsel %vm522, %v531, 0
        %548 = vmatprep.subr.mxu0 0.0
        %549 = vmatpush1.msra.mxu0 0.0
        %550 = vmatprep.subr.mxu0 0.0
        %551 = vmatpush1.msra.mxu0 0.0
        %552 = vmatprep.subr.mxu0 0.0
        %553 = vmatpush1.msra.mxu0 0.0
        %554 = vmatprep.subr.mxu0 0.0
        %555 = vmatpush1.msra.mxu0 0.0
        %556 = vmatprep.subr.mxu0 0.0
        %557 = vmatpush1.msra.mxu0 0.0
        %558 = vmatprep.subr.mxu0 0.0
        %559 = vmatpush1.msra.mxu0 0.0
        %560 = vmatprep.subr.mxu0 0.0
        %561 = vmatpush1.msra.mxu0 0.0
        %562 = vmatprep.subr.mxu0 0.0
        %563 = vmatpush1.msra.mxu0 0.0
        %564 = vmatprep.subr.mxu0 0.0
        %565 = vmatpush1.msra.mxu0 0.0
        %566 = vmatprep.subr.mxu0 0.0
        %567 = vmatpush1.msra.mxu0 0.0
        %568 = vmatprep.subr.mxu0 0.0
        %569 = vmatpush1.msra.mxu0 0.0
        %570 = vmatprep.subr.mxu0 0.0
        %571 = vmatpush1.msra.mxu0 0.0
        %572 = vmatprep.subr.mxu0 0.0
        %573 = vmatpush1.msra.mxu0 0.0
        %574 = vmatprep.subr.mxu0 %v546
        %575 = vmatpush1.msra.mxu0 %v544
        %576 = vmatprep.subr.mxu0 %v532
        %577 = vmatpush1.msra.mxu0 %v530
        %578 = vmatprep.subr.mxu0 %v528
        %579 = vmatpush1.msra.mxu0 %v525
        %580 = vmatprep.subr.mxu0 0.0
        %581 = vmatpush2.msra.mxu0 0.0
        %582 = vmatprep.subr.mxu0 0.0
        %583 = vmatpush2.msra.mxu0 0.0
        %584 = vmatprep.subr.mxu0 0.0
        %585 = vmatpush2.msra.mxu0 0.0
        %586 = vmatprep.subr.mxu0 0.0
        %587 = vmatpush2.msra.mxu0 0.0
        %588 = vmatprep.subr.mxu0 0.0
        %589 = vmatpush2.msra.mxu0 0.0
        %590 = vmatprep.subr.mxu0 0.0
        %591 = vmatpush2.msra.mxu0 0.0
        %592 = vmatprep.subr.mxu0 0.0
        %593 = vmatpush2.msra.mxu0 0.0
        %594 = vmatprep.subr.mxu0 0.0
        %595 = vmatpush2.msra.mxu0 0.0
        %596 = vmatprep.subr.mxu0 0.0
        %597 = vmatpush2.msra.mxu0 0.0
        %598 = vmatprep.subr.mxu0 0.0
        %599 = vmatpush2.msra.mxu0 0.0
        %600 = vmatprep.subr.mxu0 0.0
        %601 = vmatpush2.msra.mxu0 0.0
        %602 = vmatprep.subr.mxu0 0.0
        %603 = vmatpush2.msra.mxu0 0.0
        %604 = vmatprep.subr.mxu0 0.0
        %605 = vmatpush2.msra.mxu0 0.0
        %606 = vmatprep.subr.mxu0 0.0
        %607 = vmatpush2.msra.mxu0 0.0
        %608 = vmatprep.subr.mxu0 0.0
        %609 = vmatpush2.msra.mxu0 0.0
        %610 = vmatprep.subr.mxu0 0.0
        %611 = vmatpush2.msra.mxu0 0.0
        %612 = vmatprep.mubr.f32.mxu0 0.0
        %613 = vmatmul.mubr.f32.gmra.mxu0 %v539
        %v614 = vpop.f32.mrf.mxu0
        %v615 = vadd.f32 0.0, %v614
        %v616 = vpop.f32.mrf.mxu0
        %v617 = vadd.f32 0.0, %v616
        %618 = vmatprep.mubr.f32.mxu0 0.0
        %619 = vmatmul.mubr.f32.gmra.mxu0 %v542
        %v620 = vpop.f32.mrf.mxu0
        %v621 = vadd.f32 0.0, %v620
        %v622 = vpop.f32.mrf.mxu0
        %v623 = vadd.f32 0.0, %v622
        %624 = vdwg.mxu0
        %v625 = vld [vmem:[%s6 + $0xc] sm:$0xff]
        %v626 = vld [vmem:[%s6 + $0x14] sm:$0xff]
        %v627 = vld [vmem:[%s6 + $0x1c] sm:$0xf]
        %v629 = vsel %vm522, %v627, 0
        %631 = vmatprep.subr.mxu0 0.0
        %632 = vmatpush1.msra.mxu0 0.0
        %633 = vmatprep.subr.mxu0 0.0
        %634 = vmatpush1.msra.mxu0 0.0
        %635 = vmatprep.subr.mxu0 0.0
        %636 = vmatpush1.msra.mxu0 0.0
        %637 = vmatprep.subr.mxu0 0.0
        %638 = vmatpush1.msra.mxu0 0.0
        %639 = vmatprep.subr.mxu0 0.0
        %640 = vmatpush1.msra.mxu0 0.0
        %641 = vmatprep.subr.mxu0 0.0
        %642 = vmatpush1.msra.mxu0 0.0
        %643 = vmatprep.subr.mxu0 0.0
        %644 = vmatpush1.msra.mxu0 0.0
        %645 = vmatprep.subr.mxu0 0.0
        %646 = vmatpush1.msra.mxu0 0.0
        %647 = vmatprep.subr.mxu0 0.0
        %648 = vmatpush1.msra.mxu0 0.0
        %649 = vmatprep.subr.mxu0 0.0
        %650 = vmatpush1.msra.mxu0 0.0
        %651 = vmatprep.subr.mxu0 0.0
        %652 = vmatpush1.msra.mxu0 0.0
        %653 = vmatprep.subr.mxu0 0.0
        %654 = vmatpush1.msra.mxu0 0.0
        %655 = vmatprep.subr.mxu0 0.0
        %656 = vmatpush1.msra.mxu0 0.0
        %657 = vmatprep.subr.mxu0 0.0
        %658 = vmatpush1.msra.mxu0 %v629
        %659 = vmatprep.subr.mxu0 0.0
        %660 = vmatpush1.msra.mxu0 %v626
        %661 = vmatprep.subr.mxu0 0.0
        %662 = vmatpush1.msra.mxu0 %v625
        %663 = vmatprep.subr.mxu0 0.0
        %664 = vmatpush2.msra.mxu0 0.0
        %665 = vmatprep.subr.mxu0 0.0
        %666 = vmatpush2.msra.mxu0 0.0
        %667 = vmatprep.subr.mxu0 0.0
        %668 = vmatpush2.msra.mxu0 0.0
        %669 = vmatprep.subr.mxu0 0.0
        %670 = vmatpush2.msra.mxu0 0.0
        %671 = vmatprep.subr.mxu0 0.0
        %672 = vmatpush2.msra.mxu0 0.0
        %673 = vmatprep.subr.mxu0 0.0
        %674 = vmatpush2.msra.mxu0 0.0
        %675 = vmatprep.subr.mxu0 0.0
        %676 = vmatpush2.msra.mxu0 0.0
        %677 = vmatprep.subr.mxu0 0.0
        %678 = vmatpush2.msra.mxu0 0.0
        %679 = vmatprep.subr.mxu0 0.0
        %680 = vmatpush2.msra.mxu0 0.0
        %681 = vmatprep.subr.mxu0 0.0
        %682 = vmatpush2.msra.mxu0 0.0
        %683 = vmatprep.subr.mxu0 0.0
        %684 = vmatpush2.msra.mxu0 0.0
        %685 = vmatprep.subr.mxu0 0.0
        %686 = vmatpush2.msra.mxu0 0.0
        %687 = vmatprep.subr.mxu0 0.0
        %688 = vmatpush2.msra.mxu0 0.0
        %689 = vmatprep.subr.mxu0 0.0
        %690 = vmatpush2.msra.mxu0 0.0
        %691 = vmatprep.subr.mxu0 0.0
        %692 = vmatpush2.msra.mxu0 0.0
        %693 = vmatprep.subr.mxu0 0.0
        %694 = vmatpush2.msra.mxu0 0.0
        %695 = vmatprep.mubr.f32.mxu0 0.0
        %696 = vmatmul.mubr.f32.gmra.mxu0 %v539
        %v697 = vpop.f32.mrf.mxu0
        %v698 = vadd.f32 0.0, %v697
        %v699 = vpop.f32.mrf.mxu0
        %700 = vmatprep.mubr.f32.mxu0 0.0
        %701 = vmatmul.mubr.f32.gmra.mxu0 %v542
        %v702 = vpop.f32.mrf.mxu0
        %v703 = vadd.f32 0.0, %v702
        %v704 = vpop.f32.mrf.mxu0
        %705 = vdwg.mxu0
        %vm706 = vcmask 97280
        %v708 = vsel %vm706, %v500, 0
        %v711 = vsel %vm706, %v501, 0
        %v714 = vsel %vm522, %v504, 0
        %v717 = vsel %vm522, %v505, 0
        %719 = vmatprep.subr.mxu0 0.0
        %720 = vmatpush1.msra.mxu0 0.0
        %721 = vmatprep.subr.mxu0 0.0
        %722 = vmatpush1.msra.mxu0 0.0
        %723 = vmatprep.subr.mxu0 0.0
        %724 = vmatpush1.msra.mxu0 0.0
        %725 = vmatprep.subr.mxu0 0.0
        %726 = vmatpush1.msra.mxu0 0.0
        %727 = vmatprep.subr.mxu0 0.0
        %728 = vmatpush1.msra.mxu0 0.0
        %729 = vmatprep.subr.mxu0 0.0
        %730 = vmatpush1.msra.mxu0 0.0
        %731 = vmatprep.subr.mxu0 0.0
        %732 = vmatpush1.msra.mxu0 0.0
        %733 = vmatprep.subr.mxu0 0.0
        %734 = vmatpush1.msra.mxu0 0.0
        %735 = vmatprep.subr.mxu0 0.0
        %736 = vmatpush1.msra.mxu0 0.0
        %737 = vmatprep.subr.mxu0 0.0
        %738 = vmatpush1.msra.mxu0 0.0
        %739 = vmatprep.subr.mxu0 0.0
        %740 = vmatpush1.msra.mxu0 0.0
        %741 = vmatprep.subr.mxu0 0.0
        %742 = vmatpush1.msra.mxu0 0.0
        %743 = vmatprep.subr.mxu0 0.0
        %744 = vmatpush1.msra.mxu0 0.0
        %745 = vmatprep.subr.mxu0 0.0
        %746 = vmatpush1.msra.mxu0 0.0
        %747 = vmatprep.subr.mxu0 %v717
        %748 = vmatpush1.msra.mxu0 %v714
        %749 = vmatprep.subr.mxu0 %v503
        %750 = vmatpush1.msra.mxu0 %v502
        %751 = vmatprep.subr.mxu0 0.0
        %752 = vmatpush2.msra.mxu0 0.0
        %753 = vmatprep.subr.mxu0 0.0
        %754 = vmatpush2.msra.mxu0 0.0
        %755 = vmatprep.subr.mxu0 0.0
        %756 = vmatpush2.msra.mxu0 0.0
        %757 = vmatprep.subr.mxu0 0.0
        %758 = vmatpush2.msra.mxu0 0.0
        %759 = vmatprep.subr.mxu0 0.0
        %760 = vmatpush2.msra.mxu0 0.0
        %761 = vmatprep.subr.mxu0 0.0
        %762 = vmatpush2.msra.mxu0 0.0
        %763 = vmatprep.subr.mxu0 0.0
        %764 = vmatpush2.msra.mxu0 0.0
        %765 = vmatprep.subr.mxu0 0.0
        %766 = vmatpush2.msra.mxu0 0.0
        %767 = vmatprep.subr.mxu0 0.0
        %768 = vmatpush2.msra.mxu0 0.0
        %769 = vmatprep.subr.mxu0 0.0
        %770 = vmatpush2.msra.mxu0 0.0
        %771 = vmatprep.subr.mxu0 0.0
        %772 = vmatpush2.msra.mxu0 0.0
        %773 = vmatprep.subr.mxu0 0.0
        %774 = vmatpush2.msra.mxu0 0.0
        %775 = vmatprep.subr.mxu0 0.0
        %776 = vmatpush2.msra.mxu0 0.0
        %777 = vmatprep.subr.mxu0 0.0
        %778 = vmatpush2.msra.mxu0 0.0
        %779 = vmatprep.subr.mxu0 0.0
        %780 = vmatpush2.msra.mxu0 0.0
        %781 = vmatprep.subr.mxu0 0.0
        %782 = vmatpush2.msra.mxu0 0.0
        %783 = vmatprep.mubr.f32.mxu0 0.0
        %784 = vmatmul.mubr.f32.gmra.mxu0 %v708
        %v785 = vpop.f32.mrf.mxu0
        %v786 = vadd.f32 %v615, %v785
        %v787 = vpop.f32.mrf.mxu0
        %v788 = vadd.f32 %v617, %v787
        %789 = vmatprep.mubr.f32.mxu0 0.0
        %790 = vmatmul.mubr.f32.gmra.mxu0 %v711
        %v791 = vpop.f32.mrf.mxu0
        %v792 = vadd.f32 %v621, %v791
        %v793 = vpop.f32.mrf.mxu0
        %v794 = vadd.f32 %v623, %v793
        %795 = vdwg.mxu0
        %v797 = vsel %vm522, %v507, 0
        %799 = vmatprep.subr.mxu0 0.0
        %800 = vmatpush1.msra.mxu0 0.0
        %801 = vmatprep.subr.mxu0 0.0
        %802 = vmatpush1.msra.mxu0 0.0
        %803 = vmatprep.subr.mxu0 0.0
        %804 = vmatpush1.msra.mxu0 0.0
        %805 = vmatprep.subr.mxu0 0.0
        %806 = vmatpush1.msra.mxu0 0.0
        %807 = vmatprep.subr.mxu0 0.0
        %808 = vmatpush1.msra.mxu0 0.0
        %809 = vmatprep.subr.mxu0 0.0
        %810 = vmatpush1.msra.mxu0 0.0
        %811 = vmatprep.subr.mxu0 0.0
        %812 = vmatpush1.msra.mxu0 0.0
        %813 = vmatprep.subr.mxu0 0.0
        %814 = vmatpush1.msra.mxu0 0.0
        %815 = vmatprep.subr.mxu0 0.0
        %816 = vmatpush1.msra.mxu0 0.0
        %817 = vmatprep.subr.mxu0 0.0
        %818 = vmatpush1.msra.mxu0 0.0
        %819 = vmatprep.subr.mxu0 0.0
        %820 = vmatpush1.msra.mxu0 0.0
        %821 = vmatprep.subr.mxu0 0.0
        %822 = vmatpush1.msra.mxu0 0.0
        %823 = vmatprep.subr.mxu0 0.0
        %824 = vmatpush1.msra.mxu0 0.0
        %825 = vmatprep.subr.mxu0 0.0
        %826 = vmatpush1.msra.mxu0 0.0
        %827 = vmatprep.subr.mxu0 0.0
        %828 = vmatpush1.msra.mxu0 %v797
        %829 = vmatprep.subr.mxu0 0.0
        %830 = vmatpush1.msra.mxu0 %v506
        %831 = vmatprep.subr.mxu0 0.0
        %832 = vmatpush2.msra.mxu0 0.0
        %833 = vmatprep.subr.mxu0 0.0
        %834 = vmatpush2.msra.mxu0 0.0
        %835 = vmatprep.subr.mxu0 0.0
        %836 = vmatpush2.msra.mxu0 0.0
        %837 = vmatprep.subr.mxu0 0.0
        %838 = vmatpush2.msra.mxu0 0.0
        %839 = vmatprep.subr.mxu0 0.0
        %840 = vmatpush2.msra.mxu0 0.0
        %841 = vmatprep.subr.mxu0 0.0
        %842 = vmatpush2.msra.mxu0 0.0
        %843 = vmatprep.subr.mxu0 0.0
        %844 = vmatpush2.msra.mxu0 0.0
        %845 = vmatprep.subr.mxu0 0.0
        %846 = vmatpush2.msra.mxu0 0.0
        %847 = vmatprep.subr.mxu0 0.0
        %848 = vmatpush2.msra.mxu0 0.0
        %849 = vmatprep.subr.mxu0 0.0
        %850 = vmatpush2.msra.mxu0 0.0
        %851 = vmatprep.subr.mxu0 0.0
        %852 = vmatpush2.msra.mxu0 0.0
        %853 = vmatprep.subr.mxu0 0.0
        %854 = vmatpush2.msra.mxu0 0.0
        %855 = vmatprep.subr.mxu0 0.0
        %856 = vmatpush2.msra.mxu0 0.0
        %857 = vmatprep.subr.mxu0 0.0
        %858 = vmatpush2.msra.mxu0 0.0
        %859 = vmatprep.subr.mxu0 0.0
        %860 = vmatpush2.msra.mxu0 0.0
        %861 = vmatprep.subr.mxu0 0.0
        %862 = vmatpush2.msra.mxu0 0.0
        %863 = vmatprep.mubr.f32.mxu0 0.0
        %864 = vmatmul.mubr.f32.gmra.mxu0 %v708
        %v865 = vpop.f32.mrf.mxu0
        %v866 = vadd.f32 %v698, %v865
        %v867 = vpop.f32.mrf.mxu0
        %868 = vmatprep.mubr.f32.mxu0 0.0
        %869 = vmatmul.mubr.f32.gmra.mxu0 %v711
        %v870 = vpop.f32.mrf.mxu0
        %v871 = vadd.f32 %v703, %v870
        %v872 = vpop.f32.mrf.mxu0
        %873 = vdwg.mxu0
        %v874 = vld [vmem:[%s460] sm:$0xff]
        %v875 = vld [vmem:[%s460 + $0x8] sm:$0xff]
        %v876 = vld [vmem:[%s5 + $0x40] sm:$0xff]
        %v877 = vld [vmem:[%s5 + $0x48] sm:$0xff]
        %vm878 = vcmask 64512
        %v880 = vsel %vm878, %v874, 0
        %v883 = vsel %vm878, %v875, 0
        %885 = vmatprep.subr.mxu0 0.0
        %886 = vmatpush1.msra.mxu0 0.0
        %887 = vmatprep.subr.mxu0 0.0
        %888 = vmatpush1.msra.mxu0 0.0
        %889 = vmatprep.subr.mxu0 0.0
        %890 = vmatpush1.msra.mxu0 0.0
        %891 = vmatprep.subr.mxu0 0.0
        %892 = vmatpush1.msra.mxu0 0.0
        %893 = vmatprep.subr.mxu0 0.0
        %894 = vmatpush1.msra.mxu0 0.0
        %895 = vmatprep.subr.mxu0 0.0
        %896 = vmatpush1.msra.mxu0 0.0
        %897 = vmatprep.subr.mxu0 0.0
        %898 = vmatpush1.msra.mxu0 0.0
        %899 = vmatprep.subr.mxu0 0.0
        %900 = vmatpush1.msra.mxu0 0.0
        %901 = vmatprep.subr.mxu0 0.0
        %902 = vmatpush1.msra.mxu0 0.0
        %903 = vmatprep.subr.mxu0 0.0
        %904 = vmatpush1.msra.mxu0 0.0
        %905 = vmatprep.subr.mxu0 0.0
        %906 = vmatpush1.msra.mxu0 0.0
        %907 = vmatprep.subr.mxu0 0.0
        %908 = vmatpush1.msra.mxu0 0.0
        %909 = vmatprep.subr.mxu0 0.0
        %910 = vmatpush1.msra.mxu0 0.0
        %911 = vmatprep.subr.mxu0 0.0
        %912 = vmatpush1.msra.mxu0 0.0
        %913 = vmatprep.subr.mxu0 0.0
        %914 = vmatpush1.msra.mxu0 0.0
        %915 = vmatprep.subr.mxu0 %v877
        %916 = vmatpush1.msra.mxu0 %v876
        %917 = vmatprep.subr.mxu0 0.0
        %918 = vmatpush2.msra.mxu0 0.0
        %919 = vmatprep.subr.mxu0 0.0
        %920 = vmatpush2.msra.mxu0 0.0
        %921 = vmatprep.subr.mxu0 0.0
        %922 = vmatpush2.msra.mxu0 0.0
        %923 = vmatprep.subr.mxu0 0.0
        %924 = vmatpush2.msra.mxu0 0.0
        %925 = vmatprep.subr.mxu0 0.0
        %926 = vmatpush2.msra.mxu0 0.0
        %927 = vmatprep.subr.mxu0 0.0
        %928 = vmatpush2.msra.mxu0 0.0
        %929 = vmatprep.subr.mxu0 0.0
        %930 = vmatpush2.msra.mxu0 0.0
        %931 = vmatprep.subr.mxu0 0.0
        %932 = vmatpush2.msra.mxu0 0.0
        %933 = vmatprep.subr.mxu0 0.0
        %934 = vmatpush2.msra.mxu0 0.0
        %935 = vmatprep.subr.mxu0 0.0
        %936 = vmatpush2.msra.mxu0 0.0
        %937 = vmatprep.subr.mxu0 0.0
        %938 = vmatpush2.msra.mxu0 0.0
        %939 = vmatprep.subr.mxu0 0.0
        %940 = vmatpush2.msra.mxu0 0.0
        %941 = vmatprep.subr.mxu0 0.0
        %942 = vmatpush2.msra.mxu0 0.0
        %943 = vmatprep.subr.mxu0 0.0
        %944 = vmatpush2.msra.mxu0 0.0
        %945 = vmatprep.subr.mxu0 0.0
        %946 = vmatpush2.msra.mxu0 0.0
        %947 = vmatprep.subr.mxu0 0.0
        %948 = vmatpush2.msra.mxu0 0.0
        %949 = vmatprep.mubr.f32.mxu0 0.0
        %950 = vmatmul.mubr.f32.gmra.mxu0 %v880
        %v951 = vpop.f32.mrf.mxu0
        %v952 = vadd.f32 0.0, %v951
        %v953 = vpop.f32.mrf.mxu0
        %v954 = vadd.f32 0.0, %v953
        %955 = vmatprep.mubr.f32.mxu0 0.0
        %956 = vmatmul.mubr.f32.gmra.mxu0 %v883
        %v957 = vpop.f32.mrf.mxu0
        %v958 = vadd.f32 0.0, %v957
        %v959 = vpop.f32.mrf.mxu0
        %v960 = vadd.f32 0.0, %v959
        %961 = vdwg.mxu0
        %v962 = vld [vmem:[%s6 + $0x20] sm:$0xff]
        %963 = vmatprep.subr.mxu0 0.0
        %964 = vmatpush1.msra.mxu0 0.0
        %965 = vmatprep.subr.mxu0 0.0
        %966 = vmatpush1.msra.mxu0 0.0
        %967 = vmatprep.subr.mxu0 0.0
        %968 = vmatpush1.msra.mxu0 0.0
        %969 = vmatprep.subr.mxu0 0.0
        %970 = vmatpush1.msra.mxu0 0.0
        %971 = vmatprep.subr.mxu0 0.0
        %972 = vmatpush1.msra.mxu0 0.0
        %973 = vmatprep.subr.mxu0 0.0
        %974 = vmatpush1.msra.mxu0 0.0
        %975 = vmatprep.subr.mxu0 0.0
        %976 = vmatpush1.msra.mxu0 0.0
        %977 = vmatprep.subr.mxu0 0.0
        %978 = vmatpush1.msra.mxu0 0.0
        %979 = vmatprep.subr.mxu0 0.0
        %980 = vmatpush1.msra.mxu0 0.0
        %981 = vmatprep.subr.mxu0 0.0
        %982 = vmatpush1.msra.mxu0 0.0
        %983 = vmatprep.subr.mxu0 0.0
        %984 = vmatpush1.msra.mxu0 0.0
        %985 = vmatprep.subr.mxu0 0.0
        %986 = vmatpush1.msra.mxu0 0.0
        %987 = vmatprep.subr.mxu0 0.0
        %988 = vmatpush1.msra.mxu0 0.0
        %989 = vmatprep.subr.mxu0 0.0
        %990 = vmatpush1.msra.mxu0 0.0
        %991 = vmatprep.subr.mxu0 0.0
        %992 = vmatpush1.msra.mxu0 0.0
        %993 = vmatprep.subr.mxu0 0.0
        %994 = vmatpush1.msra.mxu0 %v962
        %995 = vmatprep.subr.mxu0 0.0
        %996 = vmatpush2.msra.mxu0 0.0
        %997 = vmatprep.subr.mxu0 0.0
        %998 = vmatpush2.msra.mxu0 0.0
        %999 = vmatprep.subr.mxu0 0.0
        %1000 = vmatpush2.msra.mxu0 0.0
        %1001 = vmatprep.subr.mxu0 0.0
        %1002 = vmatpush2.msra.mxu0 0.0
        %1003 = vmatprep.subr.mxu0 0.0
        %1004 = vmatpush2.msra.mxu0 0.0
        %1005 = vmatprep.subr.mxu0 0.0
        %1006 = vmatpush2.msra.mxu0 0.0
        %1007 = vmatprep.subr.mxu0 0.0
        %1008 = vmatpush2.msra.mxu0 0.0
        %1009 = vmatprep.subr.mxu0 0.0
        %1010 = vmatpush2.msra.mxu0 0.0
        %1011 = vmatprep.subr.mxu0 0.0
        %1012 = vmatpush2.msra.mxu0 0.0
        %1013 = vmatprep.subr.mxu0 0.0
        %1014 = vmatpush2.msra.mxu0 0.0
        %1015 = vmatprep.subr.mxu0 0.0
        %1016 = vmatpush2.msra.mxu0 0.0
        %1017 = vmatprep.subr.mxu0 0.0
        %1018 = vmatpush2.msra.mxu0 0.0
        %1019 = vmatprep.subr.mxu0 0.0
        %1020 = vmatpush2.msra.mxu0 0.0
        %1021 = vmatprep.subr.mxu0 0.0
        %1022 = vmatpush2.msra.mxu0 0.0
        %1023 = vmatprep.subr.mxu0 0.0
        %1024 = vmatpush2.msra.mxu0 0.0
        %1025 = vmatprep.subr.mxu0 0.0
        %1026 = vmatpush2.msra.mxu0 0.0
        %1027 = vmatprep.mubr.f32.mxu0 0.0
        %1028 = vmatmul.mubr.f32.gmra.mxu0 %v880
        %v1029 = vpop.f32.mrf.mxu0
        %v1030 = vadd.f32 0.0, %v1029
        %v1031 = vpop.f32.mrf.mxu0
        %1032 = vmatprep.mubr.f32.mxu0 0.0
        %1033 = vmatmul.mubr.f32.gmra.mxu0 %v883
        %v1034 = vpop.f32.mrf.mxu0
        %v1035 = vadd.f32 0.0, %v1034
        %v1036 = vpop.f32.mrf.mxu0
        %1037 = vdwg.mxu0
        %v1038 = vadd.f32 %v786, %v952
        %v1039 = vadd.f32 %v788, %v954
        %v1040 = vadd.f32 %v792, %v958
        %v1041 = vadd.f32 %v794, %v960
        %v1042 = vadd.f32 %v866, %v1030
        %v1043 = vadd.f32 %v871, %v1035
        %v1044 = vld [vmem:[%s474] sm:$0xff]
        %v1045 = vld [vmem:[%s474 + $0x8] sm:$0xff]
        %v1046 = vld [vmem:[%s5 + $0x50] sm:$0xff]
        %v1047 = vld [vmem:[%s5 + $0x58] sm:$0xff]
        %v1048 = vld [vmem:[%s5 + $0x60] sm:$0xff]
        %v1049 = vld [vmem:[%s5 + $0x68] sm:$0xff]
        %vm1050 = vcmask 130048
        %v1052 = vsel %vm1050, %v1044, 0
        %v1055 = vsel %vm1050, %v1045, 0
        %1057 = vmatprep.subr.mxu0 0.0
        %1058 = vmatpush1.msra.mxu0 0.0
        %1059 = vmatprep.subr.mxu0 0.0
        %1060 = vmatpush1.msra.mxu0 0.0
        %1061 = vmatprep.subr.mxu0 0.0
        %1062 = vmatpush1.msra.mxu0 0.0
        %1063 = vmatprep.subr.mxu0 0.0
        %1064 = vmatpush1.msra.mxu0 0.0
        %1065 = vmatprep.subr.mxu0 0.0
        %1066 = vmatpush1.msra.mxu0 0.0
        %1067 = vmatprep.subr.mxu0 0.0
        %1068 = vmatpush1.msra.mxu0 0.0
        %1069 = vmatprep.subr.mxu0 0.0
        %1070 = vmatpush1.msra.mxu0 0.0
        %1071 = vmatprep.subr.mxu0 0.0
        %1072 = vmatpush1.msra.mxu0 0.0
        %1073 = vmatprep.subr.mxu0 0.0
        %1074 = vmatpush1.msra.mxu0 0.0
        %1075 = vmatprep.subr.mxu0 0.0
        %1076 = vmatpush1.msra.mxu0 0.0
        %1077 = vmatprep.subr.mxu0 0.0
        %1078 = vmatpush1.msra.mxu0 0.0
        %1079 = vmatprep.subr.mxu0 0.0
        %1080 = vmatpush1.msra.mxu0 0.0
        %1081 = vmatprep.subr.mxu0 0.0
        %1082 = vmatpush1.msra.mxu0 0.0
        %1083 = vmatprep.subr.mxu0 0.0
        %1084 = vmatpush1.msra.mxu0 0.0
        %1085 = vmatprep.subr.mxu0 %v1049
        %1086 = vmatpush1.msra.mxu0 %v1048
        %1087 = vmatprep.subr.mxu0 %v1047
        %1088 = vmatpush1.msra.mxu0 %v1046
        %1089 = vmatprep.subr.mxu0 0.0
        %1090 = vmatpush2.msra.mxu0 0.0
        %1091 = vmatprep.subr.mxu0 0.0
        %1092 = vmatpush2.msra.mxu0 0.0
        %1093 = vmatprep.subr.mxu0 0.0
        %1094 = vmatpush2.msra.mxu0 0.0
        %1095 = vmatprep.subr.mxu0 0.0
        %1096 = vmatpush2.msra.mxu0 0.0
        %1097 = vmatprep.subr.mxu0 0.0
        %1098 = vmatpush2.msra.mxu0 0.0
        %1099 = vmatprep.subr.mxu0 0.0
        %1100 = vmatpush2.msra.mxu0 0.0
        %1101 = vmatprep.subr.mxu0 0.0
        %1102 = vmatpush2.msra.mxu0 0.0
        %1103 = vmatprep.subr.mxu0 0.0
        %1104 = vmatpush2.msra.mxu0 0.0
        %1105 = vmatprep.subr.mxu0 0.0
        %1106 = vmatpush2.msra.mxu0 0.0
        %1107 = vmatprep.subr.mxu0 0.0
        %1108 = vmatpush2.msra.mxu0 0.0
        %1109 = vmatprep.subr.mxu0 0.0
        %1110 = vmatpush2.msra.mxu0 0.0
        %1111 = vmatprep.subr.mxu0 0.0
        %1112 = vmatpush2.msra.mxu0 0.0
        %1113 = vmatprep.subr.mxu0 0.0
        %1114 = vmatpush2.msra.mxu0 0.0
        %1115 = vmatprep.subr.mxu0 0.0
        %1116 = vmatpush2.msra.mxu0 0.0
        %1117 = vmatprep.subr.mxu0 0.0
        %1118 = vmatpush2.msra.mxu0 0.0
        %1119 = vmatprep.subr.mxu0 0.0
        %1120 = vmatpush2.msra.mxu0 0.0
        %1121 = vmatprep.mubr.f32.mxu0 0.0
        %1122 = vmatmul.mubr.f32.gmra.mxu0 %v1052
        %v1123 = vpop.f32.mrf.mxu0
        %v1124 = vadd.f32 0.0, %v1123
        %v1125 = vpop.f32.mrf.mxu0
        %v1126 = vadd.f32 0.0, %v1125
        %1127 = vmatprep.mubr.f32.mxu0 0.0
        %1128 = vmatmul.mubr.f32.gmra.mxu0 %v1055
        %v1129 = vpop.f32.mrf.mxu0
        %v1130 = vadd.f32 0.0, %v1129
        %v1131 = vpop.f32.mrf.mxu0
        %v1132 = vadd.f32 0.0, %v1131
        %1133 = vdwg.mxu0
        %v1134 = vld [vmem:[%s6 + $0x28] sm:$0xff]
        %v1135 = vld [vmem:[%s6 + $0x30] sm:$0xff]
        %1136 = vmatprep.subr.mxu0 0.0
        %1137 = vmatpush1.msra.mxu0 0.0
        %1138 = vmatprep.subr.mxu0 0.0
        %1139 = vmatpush1.msra.mxu0 0.0
        %1140 = vmatprep.subr.mxu0 0.0
        %1141 = vmatpush1.msra.mxu0 0.0
        %1142 = vmatprep.subr.mxu0 0.0
        %1143 = vmatpush1.msra.mxu0 0.0
        %1144 = vmatprep.subr.mxu0 0.0
        %1145 = vmatpush1.msra.mxu0 0.0
        %1146 = vmatprep.subr.mxu0 0.0
        %1147 = vmatpush1.msra.mxu0 0.0
        %1148 = vmatprep.subr.mxu0 0.0
        %1149 = vmatpush1.msra.mxu0 0.0
        %1150 = vmatprep.subr.mxu0 0.0
        %1151 = vmatpush1.msra.mxu0 0.0
        %1152 = vmatprep.subr.mxu0 0.0
        %1153 = vmatpush1.msra.mxu0 0.0
        %1154 = vmatprep.subr.mxu0 0.0
        %1155 = vmatpush1.msra.mxu0 0.0
        %1156 = vmatprep.subr.mxu0 0.0
        %1157 = vmatpush1.msra.mxu0 0.0
        %1158 = vmatprep.subr.mxu0 0.0
        %1159 = vmatpush1.msra.mxu0 0.0
        %1160 = vmatprep.subr.mxu0 0.0
        %1161 = vmatpush1.msra.mxu0 0.0
        %1162 = vmatprep.subr.mxu0 0.0
        %1163 = vmatpush1.msra.mxu0 0.0
        %1164 = vmatprep.subr.mxu0 0.0
        %1165 = vmatpush1.msra.mxu0 %v1135
        %1166 = vmatprep.subr.mxu0 0.0
        %1167 = vmatpush1.msra.mxu0 %v1134
        %1168 = vmatprep.subr.mxu0 0.0
        %1169 = vmatpush2.msra.mxu0 0.0
        %1170 = vmatprep.subr.mxu0 0.0
        %1171 = vmatpush2.msra.mxu0 0.0
        %1172 = vmatprep.subr.mxu0 0.0
        %1173 = vmatpush2.msra.mxu0 0.0
        %1174 = vmatprep.subr.mxu0 0.0
        %1175 = vmatpush2.msra.mxu0 0.0
        %1176 = vmatprep.subr.mxu0 0.0
        %1177 = vmatpush2.msra.mxu0 0.0
        %1178 = vmatprep.subr.mxu0 0.0
        %1179 = vmatpush2.msra.mxu0 0.0
        %1180 = vmatprep.subr.mxu0 0.0
        %1181 = vmatpush2.msra.mxu0 0.0
        %1182 = vmatprep.subr.mxu0 0.0
        %1183 = vmatpush2.msra.mxu0 0.0
        %1184 = vmatprep.subr.mxu0 0.0
        %1185 = vmatpush2.msra.mxu0 0.0
        %1186 = vmatprep.subr.mxu0 0.0
        %1187 = vmatpush2.msra.mxu0 0.0
        %1188 = vmatprep.subr.mxu0 0.0
        %1189 = vmatpush2.msra.mxu0 0.0
        %1190 = vmatprep.subr.mxu0 0.0
        %1191 = vmatpush2.msra.mxu0 0.0
        %1192 = vmatprep.subr.mxu0 0.0
        %1193 = vmatpush2.msra.mxu0 0.0
        %1194 = vmatprep.subr.mxu0 0.0
        %1195 = vmatpush2.msra.mxu0 0.0
        %1196 = vmatprep.subr.mxu0 0.0
        %1197 = vmatpush2.msra.mxu0 0.0
        %1198 = vmatprep.subr.mxu0 0.0
        %1199 = vmatpush2.msra.mxu0 0.0
        %1200 = vmatprep.mubr.f32.mxu0 0.0
        %1201 = vmatmul.mubr.f32.gmra.mxu0 %v1052
        %v1202 = vpop.f32.mrf.mxu0
        %v1203 = vadd.f32 0.0, %v1202
        %v1204 = vpop.f32.mrf.mxu0
        %1205 = vmatprep.mubr.f32.mxu0 0.0
        %1206 = vmatmul.mubr.f32.gmra.mxu0 %v1055
        %v1207 = vpop.f32.mrf.mxu0
        %v1208 = vadd.f32 0.0, %v1207
        %v1209 = vpop.f32.mrf.mxu0
        %1210 = vdwg.mxu0
        %v1211 = vadd.f32 %v1038, %v1124
        %v1212 = vadd.f32 %v1039, %v1126
        %v1213 = vadd.f32 %v1040, %v1130
        %v1214 = vadd.f32 %v1041, %v1132
        %v1215 = vadd.f32 %v1042, %v1203
        %v1216 = vadd.f32 %v1043, %v1208
        %v1217 = vld [vmem:[%s488] sm:$0xff]
        %v1218 = vld [vmem:[%s488 + $0x8] sm:$0xff]
        %v1219 = vld [vmem:[%s5 + $0x70] sm:$0x3f]
        %v1220 = vld [vmem:[%s5 + $0x78] sm:$0x3f]
        %vm1221 = vcmask 48128
        %v1223 = vsel %vm1221, %v1217, 0
        %v1226 = vsel %vm1221, %v1218, 0
        %vm1228 = vcmask 1045504
        %v1230 = vsel %vm1228, %v1219, 0
        %v1233 = vsel %vm1228, %v1220, 0
        %1235 = vmatprep.subr.mxu0 0.0
        %1236 = vmatpush1.msra.mxu0 0.0
        %1237 = vmatprep.subr.mxu0 0.0
        %1238 = vmatpush1.msra.mxu0 0.0
        %1239 = vmatprep.subr.mxu0 0.0
        %1240 = vmatpush1.msra.mxu0 0.0
        %1241 = vmatprep.subr.mxu0 0.0
        %1242 = vmatpush1.msra.mxu0 0.0
        %1243 = vmatprep.subr.mxu0 0.0
        %1244 = vmatpush1.msra.mxu0 0.0
        %1245 = vmatprep.subr.mxu0 0.0
        %1246 = vmatpush1.msra.mxu0 0.0
        %1247 = vmatprep.subr.mxu0 0.0
        %1248 = vmatpush1.msra.mxu0 0.0
        %1249 = vmatprep.subr.mxu0 0.0
        %1250 = vmatpush1.msra.mxu0 0.0
        %1251 = vmatprep.subr.mxu0 0.0
        %1252 = vmatpush1.msra.mxu0 0.0
        %1253 = vmatprep.subr.mxu0 0.0
        %1254 = vmatpush1.msra.mxu0 0.0
        %1255 = vmatprep.subr.mxu0 0.0
        %1256 = vmatpush1.msra.mxu0 0.0
        %1257 = vmatprep.subr.mxu0 0.0
        %1258 = vmatpush1.msra.mxu0 0.0
        %1259 = vmatprep.subr.mxu0 0.0
        %1260 = vmatpush1.msra.mxu0 0.0
        %1261 = vmatprep.subr.mxu0 0.0
        %1262 = vmatpush1.msra.mxu0 0.0
        %1263 = vmatprep.subr.mxu0 0.0
        %1264 = vmatpush1.msra.mxu0 0.0
        %1265 = vmatprep.subr.mxu0 %v1233
        %1266 = vmatpush1.msra.mxu0 %v1230
        %1267 = vmatprep.subr.mxu0 0.0
        %1268 = vmatpush2.msra.mxu0 0.0
        %1269 = vmatprep.subr.mxu0 0.0
        %1270 = vmatpush2.msra.mxu0 0.0
        %1271 = vmatprep.subr.mxu0 0.0
        %1272 = vmatpush2.msra.mxu0 0.0
        %1273 = vmatprep.subr.mxu0 0.0
        %1274 = vmatpush2.msra.mxu0 0.0
        %1275 = vmatprep.subr.mxu0 0.0
        %1276 = vmatpush2.msra.mxu0 0.0
        %1277 = vmatprep.subr.mxu0 0.0
        %1278 = vmatpush2.msra.mxu0 0.0
        %1279 = vmatprep.subr.mxu0 0.0
        %1280 = vmatpush2.msra.mxu0 0.0
        %1281 = vmatprep.subr.mxu0 0.0
        %1282 = vmatpush2.msra.mxu0 0.0
        %1283 = vmatprep.subr.mxu0 0.0
        %1284 = vmatpush2.msra.mxu0 0.0
        %1285 = vmatprep.subr.mxu0 0.0
        %1286 = vmatpush2.msra.mxu0 0.0
        %1287 = vmatprep.subr.mxu0 0.0
        %1288 = vmatpush2.msra.mxu0 0.0
        %1289 = vmatprep.subr.mxu0 0.0
        %1290 = vmatpush2.msra.mxu0 0.0
        %1291 = vmatprep.subr.mxu0 0.0
        %1292 = vmatpush2.msra.mxu0 0.0
        %1293 = vmatprep.subr.mxu0 0.0
        %1294 = vmatpush2.msra.mxu0 0.0
        %1295 = vmatprep.subr.mxu0 0.0
        %1296 = vmatpush2.msra.mxu0 0.0
        %1297 = vmatprep.subr.mxu0 0.0
        %1298 = vmatpush2.msra.mxu0 0.0
        %1299 = vmatprep.mubr.f32.mxu0 0.0
        %1300 = vmatmul.mubr.f32.gmra.mxu0 %v1223
        %v1301 = vpop.f32.mrf.mxu0
        %v1302 = vadd.f32 0.0, %v1301
        %v1303 = vpop.f32.mrf.mxu0
        %v1304 = vadd.f32 0.0, %v1303
        %1305 = vmatprep.mubr.f32.mxu0 0.0
        %1306 = vmatmul.mubr.f32.gmra.mxu0 %v1226
        %v1307 = vpop.f32.mrf.mxu0
        %v1308 = vadd.f32 0.0, %v1307
        %v1309 = vpop.f32.mrf.mxu0
        %v1310 = vadd.f32 0.0, %v1309
        %1311 = vdwg.mxu0
        %v1312 = vld [vmem:[%s6 + $0x38] sm:$0x3f]
        %v1314 = vsel %vm1228, %v1312, 0
        %1316 = vmatprep.subr.mxu0 0.0
        %1317 = vmatpush1.msra.mxu0 0.0
        %1318 = vmatprep.subr.mxu0 0.0
        %1319 = vmatpush1.msra.mxu0 0.0
        %1320 = vmatprep.subr.mxu0 0.0
        %1321 = vmatpush1.msra.mxu0 0.0
        %1322 = vmatprep.subr.mxu0 0.0
        %1323 = vmatpush1.msra.mxu0 0.0
        %1324 = vmatprep.subr.mxu0 0.0
        %1325 = vmatpush1.msra.mxu0 0.0
        %1326 = vmatprep.subr.mxu0 0.0
        %1327 = vmatpush1.msra.mxu0 0.0
        %1328 = vmatprep.subr.mxu0 0.0
        %1329 = vmatpush1.msra.mxu0 0.0
        %1330 = vmatprep.subr.mxu0 0.0
        %1331 = vmatpush1.msra.mxu0 0.0
        %1332 = vmatprep.subr.mxu0 0.0
        %1333 = vmatpush1.msra.mxu0 0.0
        %1334 = vmatprep.subr.mxu0 0.0
        %1335 = vmatpush1.msra.mxu0 0.0
        %1336 = vmatprep.subr.mxu0 0.0
        %1337 = vmatpush1.msra.mxu0 0.0
        %1338 = vmatprep.subr.mxu0 0.0
        %1339 = vmatpush1.msra.mxu0 0.0
        %1340 = vmatprep.subr.mxu0 0.0
        %1341 = vmatpush1.msra.mxu0 0.0
        %1342 = vmatprep.subr.mxu0 0.0
        %1343 = vmatpush1.msra.mxu0 0.0
        %1344 = vmatprep.subr.mxu0 0.0
        %1345 = vmatpush1.msra.mxu0 0.0
        %1346 = vmatprep.subr.mxu0 0.0
        %1347 = vmatpush1.msra.mxu0 %v1314
        %1348 = vmatprep.subr.mxu0 0.0
        %1349 = vmatpush2.msra.mxu0 0.0
        %1350 = vmatprep.subr.mxu0 0.0
        %1351 = vmatpush2.msra.mxu0 0.0
        %1352 = vmatprep.subr.mxu0 0.0
        %1353 = vmatpush2.msra.mxu0 0.0
        %1354 = vmatprep.subr.mxu0 0.0
        %1355 = vmatpush2.msra.mxu0 0.0
        %1356 = vmatprep.subr.mxu0 0.0
        %1357 = vmatpush2.msra.mxu0 0.0
        %1358 = vmatprep.subr.mxu0 0.0
        %1359 = vmatpush2.msra.mxu0 0.0
        %1360 = vmatprep.subr.mxu0 0.0
        %1361 = vmatpush2.msra.mxu0 0.0
        %1362 = vmatprep.subr.mxu0 0.0
        %1363 = vmatpush2.msra.mxu0 0.0
        %1364 = vmatprep.subr.mxu0 0.0
        %1365 = vmatpush2.msra.mxu0 0.0
        %1366 = vmatprep.subr.mxu0 0.0
        %1367 = vmatpush2.msra.mxu0 0.0
        %1368 = vmatprep.subr.mxu0 0.0
        %1369 = vmatpush2.msra.mxu0 0.0
        %1370 = vmatprep.subr.mxu0 0.0
        %1371 = vmatpush2.msra.mxu0 0.0
        %1372 = vmatprep.subr.mxu0 0.0
        %1373 = vmatpush2.msra.mxu0 0.0
        %1374 = vmatprep.subr.mxu0 0.0
        %1375 = vmatpush2.msra.mxu0 0.0
        %1376 = vmatprep.subr.mxu0 0.0
        %1377 = vmatpush2.msra.mxu0 0.0
        %1378 = vmatprep.subr.mxu0 0.0
        %1379 = vmatpush2.msra.mxu0 0.0
        %1380 = vmatprep.mubr.f32.mxu0 0.0
        %1381 = vmatmul.mubr.f32.gmra.mxu0 %v1223
        %v1382 = vpop.f32.mrf.mxu0
        %v1383 = vadd.f32 0.0, %v1382
        %v1384 = vpop.f32.mrf.mxu0
        %1385 = vmatprep.mubr.f32.mxu0 0.0
        %1386 = vmatmul.mubr.f32.gmra.mxu0 %v1226
        %v1387 = vpop.f32.mrf.mxu0
        %v1388 = vadd.f32 0.0, %v1387
        %v1389 = vpop.f32.mrf.mxu0
        %1390 = vdwg.mxu0
        %v1391 = vadd.f32 %v1211, %v1302
        %v1392 = vadd.f32 %v1212, %v1304
        %v1393 = vadd.f32 %v1213, %v1308
        %v1394 = vadd.f32 %v1214, %v1310
        %v1395 = vadd.f32 %v1215, %v1383
        %v1396 = vadd.f32 %v1216, %v1388
        %vm1397 = vcmp.ne.f32.partialorder %v1395, 0.0
        %vm1398 = vcmp.ne.f32.partialorder %v1396, 0.0
        %v1399 = vsel %vm1397, %v1395, 1.0
        %v1400 = vsel %vm1398, %v1396, 1.0
        %v1401 = vlaneseq
        %v1402 = vand.u32 %v1401, 127
        %vm1403 = vcmp.eq.s32.totalorder %v1402, 1
        %v1404 = vsel %vm1403, 1.0, %v1399
        %v1405 = vsel %vm1403, 1.0, %v1400
        %vm1406 = vcmp.eq.s32.totalorder %v1402, 0
        %1408 = vset.pattern.permute.xlu0 1
        %1409 = vperm.xlu0 %1408, %v1399
        %v1410 = vpop.permute.xlu0 %1409
        %1413 = vset.pattern.permute.xlu0 1
        %1414 = vperm.xlu0 %1413, %v1400
        %v1415 = vpop.permute.xlu0 %1414
        %v1417 = vsel %vm1406, %v1410, 1.0
        %v1418 = vsel %vm1406, %v1415, 1.0
        %v1419 = vmul.f32 %v1404, %v1417
        %v1420 = vmul.f32 %v1405, %v1418
        %v1421 = vrcp.pop %v1419
        %v1422 = vrcp.pop %v1420
        %v1423 = vmul.f32 %v1419, %v1421
        %v1424 = vmul.f32 %v1420, %v1422
        %v1425 = vsub.f32 2.0, %v1423
        %v1426 = vsub.f32 2.0, %v1424
        %v1427 = vmul.f32 %v1421, %v1425
        %v1428 = vmul.f32 %v1422, %v1426
        %v1429 = vld [vmem:[%s7] sm:$0x1f]
        %v1430 = vld [vmem:[%s7 + $0x8] sm:$0x1f]
        %vm1431 = vcmask 39936
        %v1433 = vsel %vm1431, %v1427, 0
        %v1436 = vsel %vm1431, %v1428, 0
        %vm1438 = vcmask 1044480
        %v1440 = vsel %vm1438, %v1429, 0
        %v1443 = vsel %vm1438, %v1430, 0
        %1445 = vmatprep.subr.mxu0 0.0
        %1446 = vmatpush1.msra.mxu0 0.0
        %1447 = vmatprep.subr.mxu0 0.0
        %1448 = vmatpush1.msra.mxu0 0.0
        %1449 = vmatprep.subr.mxu0 0.0
        %1450 = vmatpush1.msra.mxu0 0.0
        %1451 = vmatprep.subr.mxu0 0.0
        %1452 = vmatpush1.msra.mxu0 0.0
        %1453 = vmatprep.subr.mxu0 0.0
        %1454 = vmatpush1.msra.mxu0 0.0
        %1455 = vmatprep.subr.mxu0 0.0
        %1456 = vmatpush1.msra.mxu0 0.0
        %1457 = vmatprep.subr.mxu0 0.0
        %1458 = vmatpush1.msra.mxu0 0.0
        %1459 = vmatprep.subr.mxu0 0.0
        %1460 = vmatpush1.msra.mxu0 0.0
        %1461 = vmatprep.subr.mxu0 0.0
        %1462 = vmatpush1.msra.mxu0 0.0
        %1463 = vmatprep.subr.mxu0 0.0
        %1464 = vmatpush1.msra.mxu0 0.0
        %1465 = vmatprep.subr.mxu0 0.0
        %1466 = vmatpush1.msra.mxu0 0.0
        %1467 = vmatprep.subr.mxu0 0.0
        %1468 = vmatpush1.msra.mxu0 0.0
        %1469 = vmatprep.subr.mxu0 0.0
        %1470 = vmatpush1.msra.mxu0 0.0
        %1471 = vmatprep.subr.mxu0 0.0
        %1472 = vmatpush1.msra.mxu0 0.0
        %1473 = vmatprep.subr.mxu0 0.0
        %1474 = vmatpush1.msra.mxu0 0.0
        %1475 = vmatprep.subr.mxu0 %v1443
        %1476 = vmatpush1.msra.mxu0 %v1440
        %1477 = vmatprep.subr.mxu0 0.0
        %1478 = vmatpush2.msra.mxu0 0.0
        %1479 = vmatprep.subr.mxu0 0.0
        %1480 = vmatpush2.msra.mxu0 0.0
        %1481 = vmatprep.subr.mxu0 0.0
        %1482 = vmatpush2.msra.mxu0 0.0
        %1483 = vmatprep.subr.mxu0 0.0
        %1484 = vmatpush2.msra.mxu0 0.0
        %1485 = vmatprep.subr.mxu0 0.0
        %1486 = vmatpush2.msra.mxu0 0.0
        %1487 = vmatprep.subr.mxu0 0.0
        %1488 = vmatpush2.msra.mxu0 0.0
        %1489 = vmatprep.subr.mxu0 0.0
        %1490 = vmatpush2.msra.mxu0 0.0
        %1491 = vmatprep.subr.mxu0 0.0
        %1492 = vmatpush2.msra.mxu0 0.0
        %1493 = vmatprep.subr.mxu0 0.0
        %1494 = vmatpush2.msra.mxu0 0.0
        %1495 = vmatprep.subr.mxu0 0.0
        %1496 = vmatpush2.msra.mxu0 0.0
        %1497 = vmatprep.subr.mxu0 0.0
        %1498 = vmatpush2.msra.mxu0 0.0
        %1499 = vmatprep.subr.mxu0 0.0
        %1500 = vmatpush2.msra.mxu0 0.0
        %1501 = vmatprep.subr.mxu0 0.0
        %1502 = vmatpush2.msra.mxu0 0.0
        %1503 = vmatprep.subr.mxu0 0.0
        %1504 = vmatpush2.msra.mxu0 0.0
        %1505 = vmatprep.subr.mxu0 0.0
        %1506 = vmatpush2.msra.mxu0 0.0
        %1507 = vmatprep.subr.mxu0 0.0
        %1508 = vmatpush2.msra.mxu0 0.0
        %1509 = vmatprep.mubr.f32.mxu0 0.0
        %1510 = vmatmul.mubr.f32.gmra.mxu0 %v1433
        %v1511 = vpop.f32.mrf.mxu0
        %v1512 = vadd.f32 0.0, %v1511
        %v1513 = vpop.f32.mrf.mxu0
        %v1514 = vadd.f32 0.0, %v1513
        %1515 = vmatprep.mubr.f32.mxu0 0.0
        %1516 = vmatmul.mubr.f32.gmra.mxu0 %v1436
        %v1517 = vpop.f32.mrf.mxu0
        %v1518 = vadd.f32 0.0, %v1517
        %v1519 = vpop.f32.mrf.mxu0
        %v1520 = vadd.f32 0.0, %v1519
        %1521 = vdwg.mxu0
        %v1522 = vmul.f32 %v1391, %v1512
        %v1523 = vmul.f32 %v1392, %v1514
        %v1524 = vmul.f32 %v1393, %v1518
        %v1525 = vmul.f32 %v1394, %v1520
        %1526 = vst [vmem:[%s423] sm:$0xff] %v1522
        %vm1527 = vcmask 261120
        %1528 = vst.msk [vmem:[%s423 + $0x8] sm:$0xff] %vm1527, %v1523
        %1529 = vst [vmem:[%s423 + $0x10] sm:$0xff] %v1524
        %1530 = vst.msk [vmem:[%s423 + $0x18] sm:$0xff] %vm1527, %v1525
        %s1531 = sand.u32 %s223, 1
        %s1532 = scalar_lea.sflag [#allocation3], %s1531
        %s1533 = sand.u32 %s223, 1
        %s1534 = smul.addr %s1533, 32
        %s1535 = scalar_lea.vmem [#allocation2], %s1534
        // Predicated region
        $region53: #{tpu_custom_call.1} parent=51 // pred_check
          %p1536 = pneg %p233
        $region54: #{tpu_custom_call.1} parent=51 // pred_check_branch
          %1538 = sbr.rel (%p1536) target = $region56
        $region55: #{tpu_custom_call.1} parent=51 // pred_region
          %s1539 = smul.u32 2, %s22
          %s1540 = ssub.s32 3, %s1539
          %p1541 = scmp.lt.s32.totalorder %s1540, 2
          %s1542 = scalar_select %p1541, %s1540, 2
          %s1543 = smul.u32 128, %s1542
          %s1544 = smul.u32 %s1543, 2
          %s1546 = ssub.s32 512, %s1544
          %1547 = vsyncadd %s1532, %s1546
          %p1548 = scmp.ne.s32.totalorder 0, %s1544
          %s1549 = smul.addr %s1539, 2
          %s1550 = smul.addr %s1549, 128
          %s1551 = scalar_lea.hbm %s8, %s1550
          %s1552 = smul.u32 16, %s1542
          %s1553 = sshll.u32 %s1535, 4
          %s1554 = int_to_ptr.vmem [resolvable:$true] %s1553
          %s1555 = sshll.u32 %s1552, 4
          %1559 = dma.vmem_to_hbm [thread:$0]  (%p1548), %s1554, %s1555, %s1551, %s1532, 256, 256, 16
        $region56: #{tpu_custom_call.1} parent=51 // pred_fallthru
          _
      $region52: #{tpu_custom_call.1} parent=5 // pred_fallthru
        _
      %p1560 = scmp.le.s32.totalorder 2, %s17
      // Predicated region
      $region57: #{tpu_custom_call.1} parent=5 // pred_check
        %p1561 = pneg %p1560
      $region58: #{tpu_custom_call.1} parent=5 // pred_check_branch
        %1563 = sbr.rel (%p1561) target = $region60
      $region59: #{tpu_custom_call.1} parent=5 // pred_region
        %s1564 = ssub.s32 %s17, 2
        // Predicated region
        $region61: #{tpu_custom_call.1} parent=59 // pred_check
          %p1565 = pneg %p239
        $region62: #{tpu_custom_call.1} parent=59 // pred_check_branch
          %1567 = sbr.rel (%p1565) target = $region64
        $region63: #{tpu_custom_call.1} parent=59 // pred_region
          %s1568 = sand.u32 %s224, 1
          %s1569 = scalar_lea.sflag [#allocation3], %s1568
          %s1570 = sand.u32 %s224, 1
          %s1571 = smul.addr %s1570, 32
          %s1572 = scalar_lea.vmem [#allocation2], %s1571
          %1573 = dma.done %s1569, 512
        $region64: #{tpu_custom_call.1} parent=59 // pred_fallthru
          _
      $region60: #{tpu_custom_call.1} parent=5 // pred_fallthru
        _
    $region6: #{tpu_custom_call.1} parent=1 // loop_footer
      %s21 = sadd.s32 1, %s17
    $region7: #{tpu_custom_call.1} parent=1 // loop_footer_branch
      %16 = sbr.rel target = $region3
    $region8: #{tpu_custom_call.1} parent=1 // loop_exit
      _
    %1574 = vsyncpa [#allocation3], 1
    %s1575 = scalar_lea.sflag [#allocation3], 1
    %1576 = vsyncpa %s1575, 1

</llo_original>
